<compile_context>
chip_gen: v7x
topology: tpu7x:2x2x1
jax: 0.10.0
libtpu: 0.0.40
codegen_flags: <defaults>
</compile_context>

<pallas_src>
import jax
import jax.numpy as jnp
from jax.experimental import pallas as pl
from jax.experimental.pallas import tpu as pltpu

EPS = 1e-5                   # PyTorch LayerNorm default
MXU_DTYPE = jnp.bfloat16     # MXU input dtype (weights pre-cast in the wrapper)


def _layernorm(x, gamma, beta):
    mu = jnp.mean(x, axis=-1, keepdims=True)
    d = x - mu
    var = jnp.mean(d * d, axis=-1, keepdims=True)
    return d * jax.lax.rsqrt(var + EPS) * gamma + beta


def _mm(a, w_bf16):
    """Matmul: activation cast to bf16, weight already bf16, f32 accumulation."""
    return jnp.dot(a.astype(MXU_DTYPE), w_bf16, preferred_element_type=jnp.float32)


def _dft_mats(length):
    """L x L real-DFT analysis matrices (f32); angles reduced mod L for accuracy."""
    k = jnp.arange(length)
    ang = (2.0 * jnp.pi / length) * ((k[:, None] * k[None, :]) % length).astype(jnp.float32)
    return jnp.cos(ang), jnp.sin(ang)


def encoder_stack_kernel(x_ref, fc_ref, fs_ref, wp_ref, bp_ref,
                         w1_ref, b1_ref, w2_ref, b2_ref,
                         g1_ref, be1_ref, g2_ref, be2_ref,
                         gf_ref, bef_ref,
                         out_ref, h_ref):
    # grid = (batch, layer); one (L, D) activation tile per batch element
    # persists in h_ref across the layer axis.
    l = pl.program_id(1)
    L = h_ref.shape[0]

    @pl.when(l == 0)
    def _():
        # Input projection (runs once per batch element).
        h_ref[...] = _mm(x_ref[0], wp_ref[...]) + bp_ref[...]

    h = h_ref[...]                                          # (L, D) f32

    # --- AutoCorrelation: irfft(rfft(h) * conj(rfft(h))) as 3 DFT matmuls ---
    # bf16 operands, f32 accumulation; all work on the otherwise-idle MXU.
    hb = h.astype(MXU_DTYPE)
    hr = jnp.dot(fc_ref[...], hb, preferred_element_type=jnp.float32)     # Re(H)
    hi = jnp.dot(fs_ref[...], hb, preferred_element_type=jnp.float32)     # -Im(H)
    power = hr * hr + hi * hi                                             # |H|^2
    corr = jnp.dot(fc_ref[...], power.astype(MXU_DTYPE),
                   preferred_element_type=jnp.float32) * (1.0 / L)

    # TODO(synk): attention is plain circular autocorrelation returning
    # corr + values; Autoformer's top-k delay aggregation / series_decomp are
    # not part of the provided EncoderLayer spec.
    h = h + (corr + h)                     # x = x + dropout(new_x), dropout = id
    h = _layernorm(h, g1_ref[0], be1_ref[0])

    # --- feed-forward: Conv1d(kernel_size=1) over NCL == pointwise linear ---
    y = _mm(h, w1_ref[0]) + b1_ref[0]
    y = jnp.maximum(y, 0.0)                                 # relu
    y = _mm(y, w2_ref[0]) + b2_ref[0]
    h = _layernorm(h + y, g2_ref[0], be2_ref[0])
    h_ref[...] = h

    @pl.when(l == pl.num_programs(1) - 1)
    def _():
        # Encoder final norm on the last time step; lane-dense (1, D) store.
        out_ref[0] = _layernorm(h[L - 1:L, :], gf_ref[...], bef_ref[...])


def autoformer_forward(x, params):
    B, L, Din = x.shape
    D = params["wp"].shape[1]
    n_layers = params["w1"].shape[0]

    # DFT matrices and matmul weights pre-cast to bf16 once (outside kernel).
    fc_f32, fs_f32 = _dft_mats(L)
    fc = fc_f32.astype(MXU_DTYPE)
    fs = fs_f32.astype(MXU_DTYPE)
    wp = params["wp"].astype(MXU_DTYPE)
    w1 = params["w1"].astype(MXU_DTYPE)
    w2 = params["w2"].astype(MXU_DTYPE)

    args = (x, fc, fs, wp, params["bp"],
            w1, params["b1"], w2, params["b2"],
            params["g1"], params["be1"], params["g2"], params["be2"],
            params["gf"], params["bef"])

    def const_spec(a):                      # whole array resident, loaded once
        nd = a.ndim
        return pl.BlockSpec(a.shape, lambda b, l: (0,) * nd)

    def layer_spec(a):                      # one layer's slice per grid step
        nd = a.ndim
        return pl.BlockSpec((1,) + a.shape[1:],
                            lambda b, l: (l,) + (0,) * (nd - 1))

    in_specs = [pl.BlockSpec((1, L, Din), lambda b, l: (b, 0, 0)),   # x (per batch)
                const_spec(fc), const_spec(fs),
                const_spec(wp), const_spec(params["bp"]),
                layer_spec(w1), layer_spec(params["b1"]),
                layer_spec(w2), layer_spec(params["b2"]),
                layer_spec(params["g1"]), layer_spec(params["be1"]),
                layer_spec(params["g2"]), layer_spec(params["be2"]),
                const_spec(params["gf"]), const_spec(params["bef"])]

    # Explicit VMEM budget: double-buffered per-step blocks + activation scratch
    # + headroom for in-kernel temporaries (hr/hi/power/corr/y).
    def nbytes(a):
        return int(a.size) * a.dtype.itemsize

    per_step = (L * Din * 4
                + sum(nbytes(a) for a in (fc, fs, wp, params["bp"],
                                          params["gf"], params["bef"]))
                + sum(nbytes(a) // n_layers
                      for a in (w1, params["b1"], w2, params["b2"],
                                params["g1"], params["be1"],
                                params["g2"], params["be2"]))
                + D * 4)
    vmem_limit = int(min(64 << 20, 2 * per_step + L * D * 4 + (16 << 20)))

    feats = pl.pallas_call(
        encoder_stack_kernel,
        out_shape=jax.ShapeDtypeStruct((B, 1, D), jnp.float32),
        grid_spec=pltpu.PrefetchScalarGridSpec(
            num_scalar_prefetch=0,
            grid=(B, n_layers),
            in_specs=in_specs,
            out_specs=pl.BlockSpec((1, 1, D), lambda b, l: (b, 0, 0)),
            scratch_shapes=[pltpu.VMEM((L, D), jnp.float32)],
        ),
        compiler_params=pltpu.CompilerParams(
            dimension_semantics=("parallel", "arbitrary"),
            vmem_limit_bytes=vmem_limit),
    )(*args)

    # Tiny (B, D) x (D, out) last-step projection in plain XLA.
    feats = feats.reshape(B, D)
    return jnp.dot(feats.astype(MXU_DTYPE), params["wo"].astype(MXU_DTYPE),
                   preferred_element_type=jnp.float32) + params["bo"]


def init_params(key, input_size, d_model, d_ff, n_layers, output_size):
    ks = jax.random.split(key, 8)
    s = 0.1
    return {
        "wp": s * jax.random.normal(ks[0], (input_size, d_model), jnp.float32),
        "bp": s * jax.random.normal(ks[1], (1, d_model), jnp.float32),
        "w1": s * jax.random.normal(ks[2], (n_layers, d_model, d_ff), jnp.float32),
        "b1": s * jax.random.normal(ks[3], (n_layers, 1, d_ff), jnp.float32),
        "w2": s * jax.random.normal(ks[4], (n_layers, d_ff, d_model), jnp.float32),
        "b2": s * jax.random.normal(ks[5], (n_layers, 1, d_model), jnp.float32),
        "g1": jnp.ones((n_layers, 1, d_model), jnp.float32),
        "be1": jnp.zeros((n_layers, 1, d_model), jnp.float32),
        "g2": jnp.ones((n_layers, 1, d_model), jnp.float32),
        "be2": jnp.zeros((n_layers, 1, d_model), jnp.float32),
        "gf": jnp.ones((1, d_model), jnp.float32),
        "bef": jnp.zeros((1, d_model), jnp.float32),
        "wo": s * jax.random.normal(ks[6], (d_model, output_size), jnp.float32),
        "bo": s * jax.random.normal(ks[7], (1, output_size), jnp.float32),
    }


def reference_forward(x, p, matched=False):
    """Pure-JAX reference mirroring the PyTorch module.

    matched=True reproduces the kernel's numerics (bf16 MXU inputs, f32
    accumulation, DFT-matmul autocorrelation); matched=False is pure-f32 with
    FFT-based autocorrelation.
    """
    B, L, _ = x.shape
    MX = MXU_DTYPE if matched else jnp.float32

    def mm(a, w):
        return jnp.dot(a.astype(MX), w.astype(MX), preferred_element_type=jnp.float32)

    def ln(v, g, b):
        mu = jnp.mean(v, axis=-1, keepdims=True)
        var = jnp.mean((v - mu) ** 2, axis=-1, keepdims=True)
        return (v - mu) / jnp.sqrt(var + EPS) * g + b

    fc_f32, fs_f32 = _dft_mats(L)

    def autocorr(h):
        if matched:
            hb = h.astype(MX)
            hr = jnp.dot(fc_f32.astype(MX), hb, preferred_element_type=jnp.float32)
            hi = jnp.dot(fs_f32.astype(MX), hb, preferred_element_type=jnp.float32)
            power = hr * hr + hi * hi
            return jnp.dot(fc_f32.astype(MX), power.astype(MX),
                           preferred_element_type=jnp.float32) * (1.0 / L)
        hf = jnp.fft.rfft(h, axis=0)
        return jnp.fft.irfft(hf * jnp.conj(hf), n=L, axis=0)

    outs = []
    for b in range(B):
        h = mm(x[b], p["wp"]) + p["bp"]
        for l in range(p["w1"].shape[0]):
            corr = autocorr(h)
            h = h + (corr + h)
            h = ln(h, p["g1"][l], p["be1"][l])
            y = jnp.maximum(mm(h, p["w1"][l]) + p["b1"][l], 0.0)
            y = mm(y, p["w2"][l]) + p["b2"][l]
            h = ln(h + y, p["g2"][l], p["be2"][l])
        hl = ln(h[L - 1:L, :], p["gf"], p["bef"])
        outs.append(mm(hl, p["wo"]) + p["bo"])
    return jnp.concatenate(outs, axis=0)


if __name__ == "__main__":
    B, L, input_size = 2, 8, 4
    d_model, d_ff, n_layers, output_size = 32, 64, 2, 1

    key = jax.random.PRNGKey(0)
    kx, kp = jax.random.split(key)
    x = jax.random.normal(kx, (B, L, input_size), jnp.float32)
    params = init_params(kp, input_size, d_model, d_ff, n_layers, output_size)

    out = jax.block_until_ready(autoformer_forward(x, params))
    assert out.shape == (B, output_size)

    # Tight check against a reference matching the kernel's bf16-input /
    # f32-accumulate matmul policy (incl. DFT-matmul autocorrelation).
    ref_m = reference_forward(x, params, matched=True)
    assert jnp.allclose(out, ref_m, atol=5e-3, rtol=5e-3), (out, ref_m)

    # Loose check against the pure-f32 FFT-based reference (bf16 MXU inputs
    # give a small, bounded deviation; LayerNorm / residuals stay f32).
    ref_f = reference_forward(x, params, matched=False)
    assert jnp.allclose(out, ref_f, atol=5e-2, rtol=5e-2), (out, ref_f)

    print("KERNEL_OK")
</pallas_src>

<mosaic_0001>
module attributes {stable_mosaic.version = 11 : i64} {
  func.func @encoder_stack_kernel(%arg0: i32, %arg1: i32, %arg2: memref<1x8x4xf32, #tpu.memory_space<vmem>>, %arg3: memref<8x8xbf16, #tpu.memory_space<vmem>>, %arg4: memref<8x8xbf16, #tpu.memory_space<vmem>>, %arg5: memref<4x32xbf16, #tpu.memory_space<vmem>>, %arg6: memref<1x32xf32, #tpu.memory_space<vmem>>, %arg7: memref<1x32x64xbf16, #tpu.memory_space<vmem>>, %arg8: memref<1x1x64xf32, #tpu.memory_space<vmem>>, %arg9: memref<1x64x32xbf16, #tpu.memory_space<vmem>>, %arg10: memref<1x1x32xf32, #tpu.memory_space<vmem>>, %arg11: memref<1x1x32xf32, #tpu.memory_space<vmem>>, %arg12: memref<1x1x32xf32, #tpu.memory_space<vmem>>, %arg13: memref<1x1x32xf32, #tpu.memory_space<vmem>>, %arg14: memref<1x1x32xf32, #tpu.memory_space<vmem>>, %arg15: memref<1x32xf32, #tpu.memory_space<vmem>>, %arg16: memref<1x32xf32, #tpu.memory_space<vmem>>, %arg17: memref<1x1x32xf32, #tpu.memory_space<vmem>>, %arg18: memref<8x32xf32, #tpu.memory_space<vmem>>) attributes {dimension_semantics = [#tpu.dimension_semantics<parallel>, #tpu.dimension_semantics<arbitrary>], iteration_bounds = array<i64: 2, 2>, scalar_prefetch = 0 : i64, scratch_operands = 1 : i64, tpu.core_type = #tpu.core_type<tc>, window_params = [{transform_indices = @transform_0, window_bounds = array<i64: 1, 8, 4>}, {pipeline_mode = #tpu.pipeline_mode<synchronous>, transform_indices = @transform_1, window_bounds = array<i64: 8, 8>}, {pipeline_mode = #tpu.pipeline_mode<synchronous>, transform_indices = @transform_2, window_bounds = array<i64: 8, 8>}, {pipeline_mode = #tpu.pipeline_mode<synchronous>, transform_indices = @transform_3, window_bounds = array<i64: 4, 32>}, {pipeline_mode = #tpu.pipeline_mode<synchronous>, transform_indices = @transform_4, window_bounds = array<i64: 1, 32>}, {transform_indices = @transform_5, window_bounds = array<i64: 1, 32, 64>}, {transform_indices = @transform_6, window_bounds = array<i64: 1, 1, 64>}, {transform_indices = @transform_7, window_bounds = array<i64: 1, 64, 32>}, {transform_indices = @transform_8, window_bounds = array<i64: 1, 1, 32>}, {transform_indices = @transform_9, window_bounds = array<i64: 1, 1, 32>}, {transform_indices = @transform_10, window_bounds = array<i64: 1, 1, 32>}, {transform_indices = @transform_11, window_bounds = array<i64: 1, 1, 32>}, {transform_indices = @transform_12, window_bounds = array<i64: 1, 1, 32>}, {pipeline_mode = #tpu.pipeline_mode<synchronous>, transform_indices = @transform_13, window_bounds = array<i64: 1, 32>}, {pipeline_mode = #tpu.pipeline_mode<synchronous>, transform_indices = @transform_14, window_bounds = array<i64: 1, 32>}, {transform_indices = @transform_15, window_bounds = array<i64: 1, 1, 32>}]} {
    %c0_i32 = arith.constant 0 : i32
    %0 = arith.cmpi eq, %arg1, %c0_i32 : i32
    %1 = arith.extui %0 : i1 to i32
    %c0_i32_0 = arith.constant 0 : i32
    %2 = arith.cmpi ne, %1, %c0_i32_0 : i32
    scf.if %2 {
      %c0_51 = arith.constant 0 : index
      %c0_52 = arith.constant 0 : index
      %c0_53 = arith.constant 0 : index
      %90 = vector.load %arg2[%c0_51, %c0_52, %c0_53] : memref<1x8x4xf32, #tpu.memory_space<vmem>>, vector<1x8x4xf32>
      %91 = vector.shape_cast %90 : vector<1x8x4xf32> to vector<8x4xf32>
      %c0_54 = arith.constant 0 : index
      %c0_55 = arith.constant 0 : index
      %92 = vector.load %arg5[%c0_54, %c0_55] : memref<4x32xbf16, #tpu.memory_space<vmem>>, vector<4x32xbf16>
      %93 = arith.truncf %91 : vector<8x4xf32> to vector<8x4xbf16>
      %cst_56 = arith.constant dense<0.000000e+00> : vector<8x32xf32>
      %94 = tpu.matmul %93, %92, %cst_56 {dimension_numbers = #tpu.dot_dimension_numbers<[1], [0], [0], [1], [0, 0, 1, 1], [], []>} : vector<8x4xbf16>, vector<4x32xbf16>, vector<8x32xf32> -> vector<8x32xf32>
      %c0_57 = arith.constant 0 : index
      %c0_58 = arith.constant 0 : index
      %95 = vector.load %arg6[%c0_57, %c0_58] : memref<1x32xf32, #tpu.memory_space<vmem>>, vector<1x32xf32>
      %96 = vector.broadcast %95 : vector<1x32xf32> to vector<8x32xf32>
      %97 = arith.addf %94, %96 : vector<8x32xf32>
      %c0_59 = arith.constant 0 : index
      %c0_60 = arith.constant 0 : index
      %98 = vector.load %arg18[%c0_59, %c0_60] : memref<8x32xf32, #tpu.memory_space<vmem>>, vector<8x32xf32>
      tpu.vector_store %arg18[%c0_59, %c0_60], %97 {strides = array<i32>} : memref<8x32xf32, #tpu.memory_space<vmem>>, vector<8x32xf32>,
    } else {
    }
    %c0 = arith.constant 0 : index
    %c0_1 = arith.constant 0 : index
    %3 = vector.load %arg18[%c0, %c0_1] : memref<8x32xf32, #tpu.memory_space<vmem>>, vector<8x32xf32>
    %4 = arith.truncf %3 : vector<8x32xf32> to vector<8x32xbf16>
    %c0_2 = arith.constant 0 : index
    %c0_3 = arith.constant 0 : index
    %5 = vector.load %arg3[%c0_2, %c0_3] : memref<8x8xbf16, #tpu.memory_space<vmem>>, vector<8x8xbf16>
    %cst = arith.constant dense<0.000000e+00> : vector<8x32xf32>
    %6 = tpu.matmul %5, %4, %cst {dimension_numbers = #tpu.dot_dimension_numbers<[1], [0], [0], [1], [0, 0, 1, 1], [], []>} : vector<8x8xbf16>, vector<8x32xbf16>, vector<8x32xf32> -> vector<8x32xf32>
    %c0_4 = arith.constant 0 : index
    %c0_5 = arith.constant 0 : index
    %7 = vector.load %arg4[%c0_4, %c0_5] : memref<8x8xbf16, #tpu.memory_space<vmem>>, vector<8x8xbf16>
    %cst_6 = arith.constant dense<0.000000e+00> : vector<8x32xf32>
    %8 = tpu.matmul %7, %4, %cst_6 {dimension_numbers = #tpu.dot_dimension_numbers<[1], [0], [0], [1], [0, 0, 1, 1], [], []>} : vector<8x8xbf16>, vector<8x32xbf16>, vector<8x32xf32> -> vector<8x32xf32>
    %9 = arith.mulf %6, %6 : vector<8x32xf32>
    %10 = arith.mulf %8, %8 : vector<8x32xf32>
    %11 = arith.addf %9, %10 : vector<8x32xf32>
    %c0_7 = arith.constant 0 : index
    %c0_8 = arith.constant 0 : index
    %12 = vector.load %arg3[%c0_7, %c0_8] : memref<8x8xbf16, #tpu.memory_space<vmem>>, vector<8x8xbf16>
    %13 = arith.truncf %11 : vector<8x32xf32> to vector<8x32xbf16>
    %cst_9 = arith.constant dense<0.000000e+00> : vector<8x32xf32>
    %14 = tpu.matmul %12, %13, %cst_9 {dimension_numbers = #tpu.dot_dimension_numbers<[1], [0], [0], [1], [0, 0, 1, 1], [], []>} : vector<8x8xbf16>, vector<8x32xbf16>, vector<8x32xf32> -> vector<8x32xf32>
    %cst_10 = arith.constant 1.250000e-01 : f32
    %15 = vector.broadcast %cst_10 : f32 to vector<8x32xf32>
    %16 = arith.mulf %14, %15 : vector<8x32xf32>
    %17 = arith.addf %16, %3 : vector<8x32xf32>
    %18 = arith.addf %3, %17 : vector<8x32xf32>
    %c0_11 = arith.constant 0 : index
    %c0_12 = arith.constant 0 : index
    %c0_13 = arith.constant 0 : index
    %19 = vector.load %arg11[%c0_11, %c0_12, %c0_13] : memref<1x1x32xf32, #tpu.memory_space<vmem>>, vector<1x1x32xf32>
    %20 = vector.shape_cast %19 : vector<1x1x32xf32> to vector<1x32xf32>
    %c0_14 = arith.constant 0 : index
    %c0_15 = arith.constant 0 : index
    %c0_16 = arith.constant 0 : index
    %21 = vector.load %arg12[%c0_14, %c0_15, %c0_16] : memref<1x1x32xf32, #tpu.memory_space<vmem>>, vector<1x1x32xf32>
    %22 = vector.shape_cast %21 : vector<1x1x32xf32> to vector<1x32xf32>
    %cst_17 = arith.constant dense<0.000000e+00> : vector<8xf32>
    %23 = vector.multi_reduction <add>, %18, %cst_17 [1] : vector<8x32xf32> to vector<8xf32>
    %24 = vector.shape_cast %23 : vector<8xf32> to vector<8x1xf32>
    %cst_18 = arith.constant 3.200000e+01 : f32
    %25 = vector.broadcast %cst_18 : f32 to vector<8x1xf32>
    %26 = arith.divf %24, %25 : vector<8x1xf32>
    %27 = vector.broadcast %26 : vector<8x1xf32> to vector<8x32xf32>
    %28 = arith.subf %18, %27 : vector<8x32xf32>
    %29 = arith.mulf %28, %28 : vector<8x32xf32>
    %cst_19 = arith.constant dense<0.000000e+00> : vector<8xf32>
    %30 = vector.multi_reduction <add>, %29, %cst_19 [1] : vector<8x32xf32> to vector<8xf32>
    %31 = vector.shape_cast %30 : vector<8xf32> to vector<8x1xf32>
    %cst_20 = arith.constant 3.200000e+01 : f32
    %32 = vector.broadcast %cst_20 : f32 to vector<8x1xf32>
    %33 = arith.divf %31, %32 : vector<8x1xf32>
    %cst_21 = arith.constant 9.99999974E-6 : f32
    %34 = vector.broadcast %cst_21 : f32 to vector<8x1xf32>
    %35 = arith.addf %33, %34 : vector<8x1xf32>
    %36 = math.rsqrt %35 : vector<8x1xf32>
    %37 = vector.broadcast %36 : vector<8x1xf32> to vector<8x32xf32>
    %38 = arith.mulf %28, %37 : vector<8x32xf32>
    %39 = vector.broadcast %20 : vector<1x32xf32> to vector<8x32xf32>
    %40 = arith.mulf %38, %39 : vector<8x32xf32>
    %41 = vector.broadcast %22 : vector<1x32xf32> to vector<8x32xf32>
    %42 = arith.addf %40, %41 : vector<8x32xf32>
    %c0_22 = arith.constant 0 : index
    %c0_23 = arith.constant 0 : index
    %c0_24 = arith.constant 0 : index
    %43 = vector.load %arg7[%c0_22, %c0_23, %c0_24] : memref<1x32x64xbf16, #tpu.memory_space<vmem>>, vector<1x32x64xbf16>
    %44 = vector.shape_cast %43 : vector<1x32x64xbf16> to vector<32x64xbf16>
    %45 = arith.truncf %42 : vector<8x32xf32> to vector<8x32xbf16>
    %cst_25 = arith.constant dense<0.000000e+00> : vector<8x64xf32>
    %46 = tpu.matmul %45, %44, %cst_25 {dimension_numbers = #tpu.dot_dimension_numbers<[1], [0], [0], [1], [0, 0, 1, 1], [], []>} : vector<8x32xbf16>, vector<32x64xbf16>, vector<8x64xf32> -> vector<8x64xf32>
    %c0_26 = arith.constant 0 : index
    %c0_27 = arith.constant 0 : index
    %c0_28 = arith.constant 0 : index
    %47 = vector.load %arg8[%c0_26, %c0_27, %c0_28] : memref<1x1x64xf32, #tpu.memory_space<vmem>>, vector<1x1x64xf32>
    %48 = vector.shape_cast %47 : vector<1x1x64xf32> to vector<1x64xf32>
    %49 = vector.broadcast %48 : vector<1x64xf32> to vector<8x64xf32>
    %50 = arith.addf %46, %49 : vector<8x64xf32>
    %cst_29 = arith.constant 0.000000e+00 : f32
    %51 = vector.broadcast %cst_29 : f32 to vector<8x64xf32>
    %52 = arith.maximumf %50, %51 : vector<8x64xf32>
    %c0_30 = arith.constant 0 : index
    %c0_31 = arith.constant 0 : index
    %c0_32 = arith.constant 0 : index
    %53 = vector.load %arg9[%c0_30, %c0_31, %c0_32] : memref<1x64x32xbf16, #tpu.memory_space<vmem>>, vector<1x64x32xbf16>
    %54 = vector.shape_cast %53 : vector<1x64x32xbf16> to vector<64x32xbf16>
    %55 = arith.truncf %52 : vector<8x64xf32> to vector<8x64xbf16>
    %cst_33 = arith.constant dense<0.000000e+00> : vector<8x32xf32>
    %56 = tpu.matmul %55, %54, %cst_33 {dimension_numbers = #tpu.dot_dimension_numbers<[1], [0], [0], [1], [0, 0, 1, 1], [], []>} : vector<8x64xbf16>, vector<64x32xbf16>, vector<8x32xf32> -> vector<8x32xf32>
    %c0_34 = arith.constant 0 : index
    %c0_35 = arith.constant 0 : index
    %c0_36 = arith.constant 0 : index
    %57 = vector.load %arg10[%c0_34, %c0_35, %c0_36] : memref<1x1x32xf32, #tpu.memory_space<vmem>>, vector<1x1x32xf32>
    %58 = vector.shape_cast %57 : vector<1x1x32xf32> to vector<1x32xf32>
    %59 = vector.broadcast %58 : vector<1x32xf32> to vector<8x32xf32>
    %60 = arith.addf %56, %59 : vector<8x32xf32>
    %61 = arith.addf %42, %60 : vector<8x32xf32>
    %c0_37 = arith.constant 0 : index
    %c0_38 = arith.constant 0 : index
    %c0_39 = arith.constant 0 : index
    %62 = vector.load %arg13[%c0_37, %c0_38, %c0_39] : memref<1x1x32xf32, #tpu.memory_space<vmem>>, vector<1x1x32xf32>
    %63 = vector.shape_cast %62 : vector<1x1x32xf32> to vector<1x32xf32>
    %c0_40 = arith.constant 0 : index
    %c0_41 = arith.constant 0 : index
    %c0_42 = arith.constant 0 : index
    %64 = vector.load %arg14[%c0_40, %c0_41, %c0_42] : memref<1x1x32xf32, #tpu.memory_space<vmem>>, vector<1x1x32xf32>
    %65 = vector.shape_cast %64 : vector<1x1x32xf32> to vector<1x32xf32>
    %cst_43 = arith.constant dense<0.000000e+00> : vector<8xf32>
    %66 = vector.multi_reduction <add>, %61, %cst_43 [1] : vector<8x32xf32> to vector<8xf32>
    %67 = vector.shape_cast %66 : vector<8xf32> to vector<8x1xf32>
    %cst_44 = arith.constant 3.200000e+01 : f32
    %68 = vector.broadcast %cst_44 : f32 to vector<8x1xf32>
    %69 = arith.divf %67, %68 : vector<8x1xf32>
    %70 = vector.broadcast %69 : vector<8x1xf32> to vector<8x32xf32>
    %71 = arith.subf %61, %70 : vector<8x32xf32>
    %72 = arith.mulf %71, %71 : vector<8x32xf32>
    %cst_45 = arith.constant dense<0.000000e+00> : vector<8xf32>
    %73 = vector.multi_reduction <add>, %72, %cst_45 [1] : vector<8x32xf32> to vector<8xf32>
    %74 = vector.shape_cast %73 : vector<8xf32> to vector<8x1xf32>
    %cst_46 = arith.constant 3.200000e+01 : f32
    %75 = vector.broadcast %cst_46 : f32 to vector<8x1xf32>
    %76 = arith.divf %74, %75 : vector<8x1xf32>
    %cst_47 = arith.constant 9.99999974E-6 : f32
    %77 = vector.broadcast %cst_47 : f32 to vector<8x1xf32>
    %78 = arith.addf %76, %77 : vector<8x1xf32>
    %79 = math.rsqrt %78 : vector<8x1xf32>
    %80 = vector.broadcast %79 : vector<8x1xf32> to vector<8x32xf32>
    %81 = arith.mulf %71, %80 : vector<8x32xf32>
    %82 = vector.broadcast %63 : vector<1x32xf32> to vector<8x32xf32>
    %83 = arith.mulf %81, %82 : vector<8x32xf32>
    %84 = vector.broadcast %65 : vector<1x32xf32> to vector<8x32xf32>
    %85 = arith.addf %83, %84 : vector<8x32xf32>
    %c0_48 = arith.constant 0 : index
    %c0_49 = arith.constant 0 : index
    %86 = vector.load %arg18[%c0_48, %c0_49] : memref<8x32xf32, #tpu.memory_space<vmem>>, vector<8x32xf32>
    tpu.vector_store %arg18[%c0_48, %c0_49], %85 {strides = array<i32>} : memref<8x32xf32, #tpu.memory_space<vmem>>, vector<8x32xf32>,
    %c1_i32 = arith.constant 1 : i32
    %87 = arith.cmpi eq, %arg1, %c1_i32 : i32
    %88 = arith.extui %87 : i1 to i32
    %c0_i32_50 = arith.constant 0 : i32
    %89 = arith.cmpi ne, %88, %c0_i32_50 : i32
    scf.if %89 {
      %90 = vector.extract_strided_slice %85 {offsets = [7, 0], sizes = [1, 32], strides = [1, 1]} : vector<8x32xf32> to vector<1x32xf32>
      %c0_51 = arith.constant 0 : index
      %c0_52 = arith.constant 0 : index
      %91 = vector.load %arg15[%c0_51, %c0_52] : memref<1x32xf32, #tpu.memory_space<vmem>>, vector<1x32xf32>
      %c0_53 = arith.constant 0 : index
      %c0_54 = arith.constant 0 : index
      %92 = vector.load %arg16[%c0_53, %c0_54] : memref<1x32xf32, #tpu.memory_space<vmem>>, vector<1x32xf32>
      %cst_55 = arith.constant dense<0.000000e+00> : vector<1xf32>
      %93 = vector.multi_reduction <add>, %90, %cst_55 [1] : vector<1x32xf32> to vector<1xf32>
      %94 = vector.shape_cast %93 : vector<1xf32> to vector<1x1xf32>
      %cst_56 = arith.constant 3.200000e+01 : f32
      %95 = vector.broadcast %cst_56 : f32 to vector<1x1xf32>
      %96 = arith.divf %94, %95 : vector<1x1xf32>
      %97 = vector.broadcast %96 : vector<1x1xf32> to vector<1x32xf32>
      %98 = arith.subf %90, %97 : vector<1x32xf32>
      %99 = arith.mulf %98, %98 : vector<1x32xf32>
      %cst_57 = arith.constant dense<0.000000e+00> : vector<1xf32>
      %100 = vector.multi_reduction <add>, %99, %cst_57 [1] : vector<1x32xf32> to vector<1xf32>
      %101 = vector.shape_cast %100 : vector<1xf32> to vector<1x1xf32>
      %cst_58 = arith.constant 3.200000e+01 : f32
      %102 = vector.broadcast %cst_58 : f32 to vector<1x1xf32>
      %103 = arith.divf %101, %102 : vector<1x1xf32>
      %cst_59 = arith.constant 9.99999974E-6 : f32
      %104 = vector.broadcast %cst_59 : f32 to vector<1x1xf32>
      %105 = arith.addf %103, %104 : vector<1x1xf32>
      %106 = math.rsqrt %105 : vector<1x1xf32>
      %107 = vector.broadcast %106 : vector<1x1xf32> to vector<1x32xf32>
      %108 = arith.mulf %98, %107 : vector<1x32xf32>
      %109 = arith.mulf %108, %91 : vector<1x32xf32>
      %110 = arith.addf %109, %92 : vector<1x32xf32>
      %c0_60 = arith.constant 0 : index
      %c0_61 = arith.constant 0 : index
      %c0_62 = arith.constant 0 : index
      %111 = vector.load %arg17[%c0_60, %c0_61, %c0_62] : memref<1x1x32xf32, #tpu.memory_space<vmem>>, vector<1x1x32xf32>
      %112 = vector.shape_cast %111 : vector<1x1x32xf32> to vector<1x32xf32>
      %113 = vector.shape_cast %110 : vector<1x32xf32> to vector<1x1x32xf32>
      tpu.vector_store %arg17[%c0_60, %c0_61, %c0_62], %113 {strides = array<i32>} : memref<1x1x32xf32, #tpu.memory_space<vmem>>, vector<1x1x32xf32>,
    } else {
    }
    return
  }
  func.func @transform_0(%arg0: i32, %arg1: i32) -> (i32, i32, i32) {
    %c0_i32 = arith.constant 0 : i32
    %c0_i32_0 = arith.constant 0 : i32
    %c0_i32_1 = arith.constant 0 : i32
    return %arg0, %c0_i32, %c0_i32_0 : i32, i32, i32
  }
  func.func @transform_1(%arg0: i32, %arg1: i32) -> (i32, i32) {
    %c0_i32 = arith.constant 0 : i32
    %c0_i32_0 = arith.constant 0 : i32
    %c0_i32_1 = arith.constant 0 : i32
    return %c0_i32, %c0_i32_0 : i32, i32
  }
  func.func @transform_2(%arg0: i32, %arg1: i32) -> (i32, i32) {
    %c0_i32 = arith.constant 0 : i32
    %c0_i32_0 = arith.constant 0 : i32
    %c0_i32_1 = arith.constant 0 : i32
    return %c0_i32, %c0_i32_0 : i32, i32
  }
  func.func @transform_3(%arg0: i32, %arg1: i32) -> (i32, i32) {
    %c0_i32 = arith.constant 0 : i32
    %c0_i32_0 = arith.constant 0 : i32
    %c0_i32_1 = arith.constant 0 : i32
    return %c0_i32, %c0_i32_0 : i32, i32
  }
  func.func @transform_4(%arg0: i32, %arg1: i32) -> (i32, i32) {
    %c0_i32 = arith.constant 0 : i32
    %c0_i32_0 = arith.constant 0 : i32
    %c0_i32_1 = arith.constant 0 : i32
    return %c0_i32, %c0_i32_0 : i32, i32
  }
  func.func @transform_5(%arg0: i32, %arg1: i32) -> (i32, i32, i32) {
    %c0_i32 = arith.constant 0 : i32
    %c0_i32_0 = arith.constant 0 : i32
    %c0_i32_1 = arith.constant 0 : i32
    return %arg1, %c0_i32, %c0_i32_0 : i32, i32, i32
  }
  func.func @transform_6(%arg0: i32, %arg1: i32) -> (i32, i32, i32) {
    %c0_i32 = arith.constant 0 : i32
    %c0_i32_0 = arith.constant 0 : i32
    %c0_i32_1 = arith.constant 0 : i32
    return %arg1, %c0_i32, %c0_i32_0 : i32, i32, i32
  }
  func.func @transform_7(%arg0: i32, %arg1: i32) -> (i32, i32, i32) {
    %c0_i32 = arith.constant 0 : i32
    %c0_i32_0 = arith.constant 0 : i32
    %c0_i32_1 = arith.constant 0 : i32
    return %arg1, %c0_i32, %c0_i32_0 : i32, i32, i32
  }
  func.func @transform_8(%arg0: i32, %arg1: i32) -> (i32, i32, i32) {
    %c0_i32 = arith.constant 0 : i32
    %c0_i32_0 = arith.constant 0 : i32
    %c0_i32_1 = arith.constant 0 : i32
    return %arg1, %c0_i32, %c0_i32_0 : i32, i32, i32
  }
  func.func @transform_9(%arg0: i32, %arg1: i32) -> (i32, i32, i32) {
    %c0_i32 = arith.constant 0 : i32
    %c0_i32_0 = arith.constant 0 : i32
    %c0_i32_1 = arith.constant 0 : i32
    return %arg1, %c0_i32, %c0_i32_0 : i32, i32, i32
  }
  func.func @transform_10(%arg0: i32, %arg1: i32) -> (i32, i32, i32) {
    %c0_i32 = arith.constant 0 : i32
    %c0_i32_0 = arith.constant 0 : i32
    %c0_i32_1 = arith.constant 0 : i32
    return %arg1, %c0_i32, %c0_i32_0 : i32, i32, i32
  }
  func.func @transform_11(%arg0: i32, %arg1: i32) -> (i32, i32, i32) {
    %c0_i32 = arith.constant 0 : i32
    %c0_i32_0 = arith.constant 0 : i32
    %c0_i32_1 = arith.constant 0 : i32
    return %arg1, %c0_i32, %c0_i32_0 : i32, i32, i32
  }
  func.func @transform_12(%arg0: i32, %arg1: i32) -> (i32, i32, i32) {
    %c0_i32 = arith.constant 0 : i32
    %c0_i32_0 = arith.constant 0 : i32
    %c0_i32_1 = arith.constant 0 : i32
    return %arg1, %c0_i32, %c0_i32_0 : i32, i32, i32
  }
  func.func @transform_13(%arg0: i32, %arg1: i32) -> (i32, i32) {
    %c0_i32 = arith.constant 0 : i32
    %c0_i32_0 = arith.constant 0 : i32
    %c0_i32_1 = arith.constant 0 : i32
    return %c0_i32, %c0_i32_0 : i32, i32
  }
  func.func @transform_14(%arg0: i32, %arg1: i32) -> (i32, i32) {
    %c0_i32 = arith.constant 0 : i32
    %c0_i32_0 = arith.constant 0 : i32
    %c0_i32_1 = arith.constant 0 : i32
    return %c0_i32, %c0_i32_0 : i32, i32
  }
  func.func @transform_15(%arg0: i32, %arg1: i32) -> (i32, i32, i32) {
    %c0_i32 = arith.constant 0 : i32
    %c0_i32_0 = arith.constant 0 : i32
    %c0_i32_1 = arith.constant 0 : i32
    return %arg0, %c0_i32, %c0_i32_0 : i32, i32, i32
  }
}

</mosaic_0001>

<llo_original>
// kernel: tpu_custom_call.1
$region0: #{tpu_custom_call.1}
  #allocation0 [shape = 'u32[]', space=smem, size = 0x4, offset = 0x4, fixed_abs, tag = 'smem constant byte address 0x4 - core index']
  #allocation1 [shape = 'u32[144,128]{1,0:T(1,128)}', space=vmem, size = 0x12000, scoped, tag = 'internal scratch']
  #allocation2 [shape = 'f32[8,32]{1,0:T(8,128)}', space=vmem, size = 0x1000, scoped, tag = 'scratch operand']
  %s0 = inlined_call_operand.vmem [shape: f32[2,8,4], index: 0, kind: input, shape index: {}]
  %s1 = inlined_call_operand.vmem [shape: bf16[8,8], index: 1, kind: input, shape index: {}]
  %s2 = inlined_call_operand.vmem [shape: bf16[8,8], index: 2, kind: input, shape index: {}]
  %s3 = inlined_call_operand.vmem [shape: bf16[4,32], index: 3, kind: input, shape index: {}]
  %s4 = inlined_call_operand.vmem [shape: f32[1,32], index: 4, kind: input, shape index: {}]
  %s5 = inlined_call_operand.vmem [shape: bf16[2,32,64], index: 5, kind: input, shape index: {}]
  %s6 = inlined_call_operand.vmem [shape: f32[2,1,64], index: 6, kind: input, shape index: {}]
  %s7 = inlined_call_operand.vmem [shape: bf16[2,64,32], index: 7, kind: input, shape index: {}]
  %s8 = inlined_call_operand.vmem [shape: f32[2,1,32], index: 8, kind: input, shape index: {}]
  %s9 = inlined_call_operand.vmem [shape: f32[2,1,32], index: 9, kind: input, shape index: {}]
  %s10 = inlined_call_operand.vmem [shape: f32[2,1,32], index: 10, kind: input, shape index: {}]
  %s11 = inlined_call_operand.vmem [shape: f32[2,1,32], index: 11, kind: input, shape index: {}]
  %s12 = inlined_call_operand.vmem [shape: f32[2,1,32], index: 12, kind: input, shape index: {}]
  %s13 = inlined_call_operand.vmem [shape: f32[1,32], index: 13, kind: input, shape index: {}]
  %s14 = inlined_call_operand.vmem [shape: f32[1,32], index: 14, kind: input, shape index: {}]
  %s15 = inlined_call_operand.hbm [shape: f32[2,1,32], index: 15, kind: output, shape index: {}]
  %s16 = sld [smem:[#allocation0]]
  $region101: #{tpu_custom_call.1} parent=0
    _
  %s18 = ssub.s32 1, %s16
  %s19 = scalar_select 0, %s18, %s16
  $region1: #{tpu_custom_call.1} parent=0
    #allocation3 [shape = 'u8[1024]{0}', space=vmem, size = 0x400, scoped, tag = 'output window, operand 0']
    #allocation4 [shape = 's32[2]{0}', space=sflag, size = 0x8, scoped, tag = 'scoped memory for tpu_custom_call.1']
    %20 = vsyncpa [#allocation4], 0
    %s21 = scalar_lea.sflag [#allocation4], 1
    %22 = vsyncpa %s21, 0
    loop: start=0, step=1, limit=6
    $region2: #{tpu_custom_call.1} parent=1 // loop_pre_header
      _
    $region3: #{tpu_custom_call.1} parent=1 // loop_header
      %s24 = sphi 0, %s28
      %p25 = scmp.ge.s32.totalorder %s24, 6
      %s31 = sphi 0, %s43
      %s32 = sphi 0, %s39
      %s33 = sphi 0, %s31
      %s34 = sphi 0, %s32
      %s35 = sphi 0, %s33
      %s36 = sphi 0, %s34
      %s46 = sphi 0, %s48
      %s49 = sphi 0, %s46
      %s50 = sphi 0, %s49
      %s66 = sphi 0, %s50
      %s70 = sphi 0, %s70
      %s72 = sphi 0, %s70
      %s73 = sphi 0, %s72
      %s87 = sphi 0, %s73
      %s91 = sphi 0, %s91
      %s93 = sphi 0, %s91
      %s94 = sphi 0, %s93
      %s108 = sphi 0, %s94
      %s112 = sphi 0, %s112
      %s114 = sphi 0, %s112
      %s115 = sphi 0, %s114
      %s129 = sphi 0, %s115
      %s133 = sphi 0, %s133
      %s135 = sphi 0, %s133
      %s136 = sphi 0, %s135
      %s150 = sphi 0, %s136
      %s156 = sphi 0, %s158
      %s159 = sphi 0, %s156
      %s160 = sphi 0, %s159
      %s176 = sphi 0, %s160
      %s182 = sphi 0, %s184
      %s185 = sphi 0, %s182
      %s186 = sphi 0, %s185
      %s202 = sphi 0, %s186
      %s208 = sphi 0, %s210
      %s211 = sphi 0, %s208
      %s212 = sphi 0, %s211
      %s228 = sphi 0, %s212
      %s234 = sphi 0, %s236
      %s237 = sphi 0, %s234
      %s238 = sphi 0, %s237
      %s254 = sphi 0, %s238
      %s260 = sphi 0, %s262
      %s263 = sphi 0, %s260
      %s264 = sphi 0, %s263
      %s280 = sphi 0, %s264
      %s286 = sphi 0, %s288
      %s289 = sphi 0, %s286
      %s290 = sphi 0, %s289
      %s306 = sphi 0, %s290
      %s312 = sphi 0, %s314
      %s315 = sphi 0, %s312
      %s316 = sphi 0, %s315
      %s332 = sphi 0, %s316
      %s338 = sphi 0, %s340
      %s341 = sphi 0, %s338
      %s342 = sphi 0, %s341
      %s358 = sphi 0, %s342
      %s362 = sphi 0, %s362
      %s364 = sphi 0, %s362
      %s365 = sphi 0, %s364
      %s379 = sphi 0, %s365
      %s383 = sphi 0, %s383
      %s385 = sphi 0, %s383
      %s386 = sphi 0, %s385
      %s400 = sphi 0, %s386
      %s406 = sphi 0, %s408
      %s409 = sphi 0, %s406
      %s410 = sphi 0, %s409
      %s426 = sphi 0, %s410
    $region4: #{tpu_custom_call.1} parent=1 // loop_header_branch
      %27 = sbr.rel (%p25) target = $region8
    $region5: #{tpu_custom_call.1} parent=1 // loop_body
      %s29 = ssub.s32 %s24, 1
      %s30 = ssub.s32 %s24, 2
      %s37 = sadd.s32 1, %s32
      %p38 = scmp.ge.s32.totalorder %s37, 2
      %s39 = scalar_select %p38, 0, %s37
      %s40 = sadd.s32 1, %s31
      %s41 = scalar_select %p38, %s40, %s31
      %p42 = scmp.ge.s32.totalorder %s41, 2
      %s43 = scalar_select %p42, 0, %s41
      %s44 = ssub.s32 %s31, %s43
      %p45 = scmp.eq.s32.totalorder %s44, 0
      %s47 = sadd.s32 %s46, 1
      %s48 = scalar_select %p45, %s46, %s47
      %p51 = pneg %p45
      %p52 = scmp.eq.s32.totalorder %s24, 3
      %p53 = por %p51, %p52
      %p54 = scmp.ne.s32.totalorder %s46, %s49
      %p55 = scmp.eq.s32.totalorder %s24, 0
      %p56 = por %p54, %p55
      %p57 = scmp.ne.s32.totalorder %s46, %s49
      %p58 = scmp.eq.s32.totalorder %s29, 3
      %p59 = por %p57, %p58
      %p60 = scmp.ne.s32.totalorder %s49, %s50
      %p61 = scmp.eq.s32.totalorder %s29, 0
      %p62 = por %p60, %p61
      %p63 = scmp.ne.s32.totalorder %s49, %s50
      %p64 = scmp.eq.s32.totalorder %s30, 3
      %p65 = por %p63, %p64
      %p67 = scmp.ne.s32.totalorder %s50, %s66
      %p68 = scmp.eq.s32.totalorder %s30, 0
      %p69 = por %p67, %p68
      %s71 = sadd.s32 %s70, 1
      %p74 = scmp.eq.s32.totalorder %s24, 3
      %p75 = scmp.ne.s32.totalorder %s70, %s72
      %p76 = scmp.eq.s32.totalorder %s24, 0
      %p77 = por %p75, %p76
      %p78 = scmp.ne.s32.totalorder %s70, %s72
      %p79 = scmp.eq.s32.totalorder %s29, 3
      %p80 = por %p78, %p79
      %p81 = scmp.ne.s32.totalorder %s72, %s73
      %p82 = scmp.eq.s32.totalorder %s29, 0
      %p83 = por %p81, %p82
      %p84 = scmp.ne.s32.totalorder %s72, %s73
      %p85 = scmp.eq.s32.totalorder %s30, 3
      %p86 = por %p84, %p85
      %p88 = scmp.ne.s32.totalorder %s73, %s87
      %p89 = scmp.eq.s32.totalorder %s30, 0
      %p90 = por %p88, %p89
      %s92 = sadd.s32 %s91, 1
      %p95 = scmp.eq.s32.totalorder %s24, 3
      %p96 = scmp.ne.s32.totalorder %s91, %s93
      %p97 = scmp.eq.s32.totalorder %s24, 0
      %p98 = por %p96, %p97
      %p99 = scmp.ne.s32.totalorder %s91, %s93
      %p100 = scmp.eq.s32.totalorder %s29, 3
      %p101 = por %p99, %p100
      %p102 = scmp.ne.s32.totalorder %s93, %s94
      %p103 = scmp.eq.s32.totalorder %s29, 0
      %p104 = por %p102, %p103
      %p105 = scmp.ne.s32.totalorder %s93, %s94
      %p106 = scmp.eq.s32.totalorder %s30, 3
      %p107 = por %p105, %p106
      %p109 = scmp.ne.s32.totalorder %s94, %s108
      %p110 = scmp.eq.s32.totalorder %s30, 0
      %p111 = por %p109, %p110
      %s113 = sadd.s32 %s112, 1
      %p116 = scmp.eq.s32.totalorder %s24, 3
      %p117 = scmp.ne.s32.totalorder %s112, %s114
      %p118 = scmp.eq.s32.totalorder %s24, 0
      %p119 = por %p117, %p118
      %p120 = scmp.ne.s32.totalorder %s112, %s114
      %p121 = scmp.eq.s32.totalorder %s29, 3
      %p122 = por %p120, %p121
      %p123 = scmp.ne.s32.totalorder %s114, %s115
      %p124 = scmp.eq.s32.totalorder %s29, 0
      %p125 = por %p123, %p124
      %p126 = scmp.ne.s32.totalorder %s114, %s115
      %p127 = scmp.eq.s32.totalorder %s30, 3
      %p128 = por %p126, %p127
      %p130 = scmp.ne.s32.totalorder %s115, %s129
      %p131 = scmp.eq.s32.totalorder %s30, 0
      %p132 = por %p130, %p131
      %s134 = sadd.s32 %s133, 1
      %p137 = scmp.eq.s32.totalorder %s24, 3
      %p138 = scmp.ne.s32.totalorder %s133, %s135
      %p139 = scmp.eq.s32.totalorder %s24, 0
      %p140 = por %p138, %p139
      %p141 = scmp.ne.s32.totalorder %s133, %s135
      %p142 = scmp.eq.s32.totalorder %s29, 3
      %p143 = por %p141, %p142
      %p144 = scmp.ne.s32.totalorder %s135, %s136
      %p145 = scmp.eq.s32.totalorder %s29, 0
      %p146 = por %p144, %p145
      %p147 = scmp.ne.s32.totalorder %s135, %s136
      %p148 = scmp.eq.s32.totalorder %s30, 3
      %p149 = por %p147, %p148
      %p151 = scmp.ne.s32.totalorder %s136, %s150
      %p152 = scmp.eq.s32.totalorder %s30, 0
      %p153 = por %p151, %p152
      %s154 = ssub.s32 %s32, %s39
      %p155 = scmp.eq.s32.totalorder %s154, 0
      %s157 = sadd.s32 %s156, 1
      %s158 = scalar_select %p155, %s156, %s157
      %p161 = pneg %p155
      %p162 = scmp.eq.s32.totalorder %s24, 3
      %p163 = por %p161, %p162
      %p164 = scmp.ne.s32.totalorder %s156, %s159
      %p165 = scmp.eq.s32.totalorder %s24, 0
      %p166 = por %p164, %p165
      %p167 = scmp.ne.s32.totalorder %s156, %s159
      %p168 = scmp.eq.s32.totalorder %s29, 3
      %p169 = por %p167, %p168
      %p170 = scmp.ne.s32.totalorder %s159, %s160
      %p171 = scmp.eq.s32.totalorder %s29, 0
      %p172 = por %p170, %p171
      %p173 = scmp.ne.s32.totalorder %s159, %s160
      %p174 = scmp.eq.s32.totalorder %s30, 3
      %p175 = por %p173, %p174
      %p177 = scmp.ne.s32.totalorder %s160, %s176
      %p178 = scmp.eq.s32.totalorder %s30, 0
      %p179 = por %p177, %p178
      %s180 = ssub.s32 %s32, %s39
      %p181 = scmp.eq.s32.totalorder %s180, 0
      %s183 = sadd.s32 %s182, 1
      %s184 = scalar_select %p181, %s182, %s183
      %p187 = pneg %p181
      %p188 = scmp.eq.s32.totalorder %s24, 3
      %p189 = por %p187, %p188
      %p190 = scmp.ne.s32.totalorder %s182, %s185
      %p191 = scmp.eq.s32.totalorder %s24, 0
      %p192 = por %p190, %p191
      %p193 = scmp.ne.s32.totalorder %s182, %s185
      %p194 = scmp.eq.s32.totalorder %s29, 3
      %p195 = por %p193, %p194
      %p196 = scmp.ne.s32.totalorder %s185, %s186
      %p197 = scmp.eq.s32.totalorder %s29, 0
      %p198 = por %p196, %p197
      %p199 = scmp.ne.s32.totalorder %s185, %s186
      %p200 = scmp.eq.s32.totalorder %s30, 3
      %p201 = por %p199, %p200
      %p203 = scmp.ne.s32.totalorder %s186, %s202
      %p204 = scmp.eq.s32.totalorder %s30, 0
      %p205 = por %p203, %p204
      %s206 = ssub.s32 %s32, %s39
      %p207 = scmp.eq.s32.totalorder %s206, 0
      %s209 = sadd.s32 %s208, 1
      %s210 = scalar_select %p207, %s208, %s209
      %p213 = pneg %p207
      %p214 = scmp.eq.s32.totalorder %s24, 3
      %p215 = por %p213, %p214
      %p216 = scmp.ne.s32.totalorder %s208, %s211
      %p217 = scmp.eq.s32.totalorder %s24, 0
      %p218 = por %p216, %p217
      %p219 = scmp.ne.s32.totalorder %s208, %s211
      %p220 = scmp.eq.s32.totalorder %s29, 3
      %p221 = por %p219, %p220
      %p222 = scmp.ne.s32.totalorder %s211, %s212
      %p223 = scmp.eq.s32.totalorder %s29, 0
      %p224 = por %p222, %p223
      %p225 = scmp.ne.s32.totalorder %s211, %s212
      %p226 = scmp.eq.s32.totalorder %s30, 3
      %p227 = por %p225, %p226
      %p229 = scmp.ne.s32.totalorder %s212, %s228
      %p230 = scmp.eq.s32.totalorder %s30, 0
      %p231 = por %p229, %p230
      %s232 = ssub.s32 %s32, %s39
      %p233 = scmp.eq.s32.totalorder %s232, 0
      %s235 = sadd.s32 %s234, 1
      %s236 = scalar_select %p233, %s234, %s235
      %p239 = pneg %p233
      %p240 = scmp.eq.s32.totalorder %s24, 3
      %p241 = por %p239, %p240
      %p242 = scmp.ne.s32.totalorder %s234, %s237
      %p243 = scmp.eq.s32.totalorder %s24, 0
      %p244 = por %p242, %p243
      %p245 = scmp.ne.s32.totalorder %s234, %s237
      %p246 = scmp.eq.s32.totalorder %s29, 3
      %p247 = por %p245, %p246
      %p248 = scmp.ne.s32.totalorder %s237, %s238
      %p249 = scmp.eq.s32.totalorder %s29, 0
      %p250 = por %p248, %p249
      %p251 = scmp.ne.s32.totalorder %s237, %s238
      %p252 = scmp.eq.s32.totalorder %s30, 3
      %p253 = por %p251, %p252
      %p255 = scmp.ne.s32.totalorder %s238, %s254
      %p256 = scmp.eq.s32.totalorder %s30, 0
      %p257 = por %p255, %p256
      %s258 = ssub.s32 %s32, %s39
      %p259 = scmp.eq.s32.totalorder %s258, 0
      %s261 = sadd.s32 %s260, 1
      %s262 = scalar_select %p259, %s260, %s261
      %p265 = pneg %p259
      %p266 = scmp.eq.s32.totalorder %s24, 3
      %p267 = por %p265, %p266
      %p268 = scmp.ne.s32.totalorder %s260, %s263
      %p269 = scmp.eq.s32.totalorder %s24, 0
      %p270 = por %p268, %p269
      %p271 = scmp.ne.s32.totalorder %s260, %s263
      %p272 = scmp.eq.s32.totalorder %s29, 3
      %p273 = por %p271, %p272
      %p274 = scmp.ne.s32.totalorder %s263, %s264
      %p275 = scmp.eq.s32.totalorder %s29, 0
      %p276 = por %p274, %p275
      %p277 = scmp.ne.s32.totalorder %s263, %s264
      %p278 = scmp.eq.s32.totalorder %s30, 3
      %p279 = por %p277, %p278
      %p281 = scmp.ne.s32.totalorder %s264, %s280
      %p282 = scmp.eq.s32.totalorder %s30, 0
      %p283 = por %p281, %p282
      %s284 = ssub.s32 %s32, %s39
      %p285 = scmp.eq.s32.totalorder %s284, 0
      %s287 = sadd.s32 %s286, 1
      %s288 = scalar_select %p285, %s286, %s287
      %p291 = pneg %p285
      %p292 = scmp.eq.s32.totalorder %s24, 3
      %p293 = por %p291, %p292
      %p294 = scmp.ne.s32.totalorder %s286, %s289
      %p295 = scmp.eq.s32.totalorder %s24, 0
      %p296 = por %p294, %p295
      %p297 = scmp.ne.s32.totalorder %s286, %s289
      %p298 = scmp.eq.s32.totalorder %s29, 3
      %p299 = por %p297, %p298
      %p300 = scmp.ne.s32.totalorder %s289, %s290
      %p301 = scmp.eq.s32.totalorder %s29, 0
      %p302 = por %p300, %p301
      %p303 = scmp.ne.s32.totalorder %s289, %s290
      %p304 = scmp.eq.s32.totalorder %s30, 3
      %p305 = por %p303, %p304
      %p307 = scmp.ne.s32.totalorder %s290, %s306
      %p308 = scmp.eq.s32.totalorder %s30, 0
      %p309 = por %p307, %p308
      %s310 = ssub.s32 %s32, %s39
      %p311 = scmp.eq.s32.totalorder %s310, 0
      %s313 = sadd.s32 %s312, 1
      %s314 = scalar_select %p311, %s312, %s313
      %p317 = pneg %p311
      %p318 = scmp.eq.s32.totalorder %s24, 3
      %p319 = por %p317, %p318
      %p320 = scmp.ne.s32.totalorder %s312, %s315
      %p321 = scmp.eq.s32.totalorder %s24, 0
      %p322 = por %p320, %p321
      %p323 = scmp.ne.s32.totalorder %s312, %s315
      %p324 = scmp.eq.s32.totalorder %s29, 3
      %p325 = por %p323, %p324
      %p326 = scmp.ne.s32.totalorder %s315, %s316
      %p327 = scmp.eq.s32.totalorder %s29, 0
      %p328 = por %p326, %p327
      %p329 = scmp.ne.s32.totalorder %s315, %s316
      %p330 = scmp.eq.s32.totalorder %s30, 3
      %p331 = por %p329, %p330
      %p333 = scmp.ne.s32.totalorder %s316, %s332
      %p334 = scmp.eq.s32.totalorder %s30, 0
      %p335 = por %p333, %p334
      %s336 = ssub.s32 %s32, %s39
      %p337 = scmp.eq.s32.totalorder %s336, 0
      %s339 = sadd.s32 %s338, 1
      %s340 = scalar_select %p337, %s338, %s339
      %p343 = pneg %p337
      %p344 = scmp.eq.s32.totalorder %s24, 3
      %p345 = por %p343, %p344
      %p346 = scmp.ne.s32.totalorder %s338, %s341
      %p347 = scmp.eq.s32.totalorder %s24, 0
      %p348 = por %p346, %p347
      %p349 = scmp.ne.s32.totalorder %s338, %s341
      %p350 = scmp.eq.s32.totalorder %s29, 3
      %p351 = por %p349, %p350
      %p352 = scmp.ne.s32.totalorder %s341, %s342
      %p353 = scmp.eq.s32.totalorder %s29, 0
      %p354 = por %p352, %p353
      %p355 = scmp.ne.s32.totalorder %s341, %s342
      %p356 = scmp.eq.s32.totalorder %s30, 3
      %p357 = por %p355, %p356
      %p359 = scmp.ne.s32.totalorder %s342, %s358
      %p360 = scmp.eq.s32.totalorder %s30, 0
      %p361 = por %p359, %p360
      %s363 = sadd.s32 %s362, 1
      %p366 = scmp.eq.s32.totalorder %s24, 3
      %p367 = scmp.ne.s32.totalorder %s362, %s364
      %p368 = scmp.eq.s32.totalorder %s24, 0
      %p369 = por %p367, %p368
      %p370 = scmp.ne.s32.totalorder %s362, %s364
      %p371 = scmp.eq.s32.totalorder %s29, 3
      %p372 = por %p370, %p371
      %p373 = scmp.ne.s32.totalorder %s364, %s365
      %p374 = scmp.eq.s32.totalorder %s29, 0
      %p375 = por %p373, %p374
      %p376 = scmp.ne.s32.totalorder %s364, %s365
      %p377 = scmp.eq.s32.totalorder %s30, 3
      %p378 = por %p376, %p377
      %p380 = scmp.ne.s32.totalorder %s365, %s379
      %p381 = scmp.eq.s32.totalorder %s30, 0
      %p382 = por %p380, %p381
      %s384 = sadd.s32 %s383, 1
      %p387 = scmp.eq.s32.totalorder %s24, 3
      %p388 = scmp.ne.s32.totalorder %s383, %s385
      %p389 = scmp.eq.s32.totalorder %s24, 0
      %p390 = por %p388, %p389
      %p391 = scmp.ne.s32.totalorder %s383, %s385
      %p392 = scmp.eq.s32.totalorder %s29, 3
      %p393 = por %p391, %p392
      %p394 = scmp.ne.s32.totalorder %s385, %s386
      %p395 = scmp.eq.s32.totalorder %s29, 0
      %p396 = por %p394, %p395
      %p397 = scmp.ne.s32.totalorder %s385, %s386
      %p398 = scmp.eq.s32.totalorder %s30, 3
      %p399 = por %p397, %p398
      %p401 = scmp.ne.s32.totalorder %s386, %s400
      %p402 = scmp.eq.s32.totalorder %s30, 0
      %p403 = por %p401, %p402
      %s404 = ssub.s32 %s31, %s43
      %p405 = scmp.eq.s32.totalorder %s404, 0
      %s407 = sadd.s32 %s406, 1
      %s408 = scalar_select %p405, %s406, %s407
      %p411 = pneg %p405
      %p412 = scmp.eq.s32.totalorder %s24, 3
      %p413 = por %p411, %p412
      %p414 = scmp.ne.s32.totalorder %s406, %s409
      %p415 = scmp.eq.s32.totalorder %s24, 0
      %p416 = por %p414, %p415
      %p417 = scmp.ne.s32.totalorder %s406, %s409
      %p418 = scmp.eq.s32.totalorder %s29, 3
      %p419 = por %p417, %p418
      %p420 = scmp.ne.s32.totalorder %s409, %s410
      %p421 = scmp.eq.s32.totalorder %s29, 0
      %p422 = por %p420, %p421
      %p423 = scmp.ne.s32.totalorder %s409, %s410
      %p424 = scmp.eq.s32.totalorder %s30, 3
      %p425 = por %p423, %p424
      %p427 = scmp.ne.s32.totalorder %s410, %s426
      %p428 = scmp.eq.s32.totalorder %s30, 0
      %p429 = por %p427, %p428
      %p430 = scmp.le.s32.totalorder 1, %s24
      %p431 = scmp.lt.s32.totalorder %s24, 5
      %p432 = pnand %p430, %p431
      %p433 = pneg %p432
      // Predicated region
      $region9: #{tpu_custom_call.1} parent=5 // pred_check
        _
      $region10: #{tpu_custom_call.1} parent=5 // pred_check_branch
        %435 = sbr.rel (%p432) target = $region12
      $region11: #{tpu_custom_call.1} parent=5 // pred_region
        %s436 = ssub.s32 %s24, 1
        // Predicated region
        $region13: #{tpu_custom_call.1} parent=11 // pred_check
          %p437 = pneg %p83
        $region14: #{tpu_custom_call.1} parent=11 // pred_check_branch
          %439 = sbr.rel (%p437) target = $region16
        $region15: #{tpu_custom_call.1} parent=11 // pred_region
          _
        $region16: #{tpu_custom_call.1} parent=11 // pred_fallthru
          _
        // Predicated region
        $region17: #{tpu_custom_call.1} parent=11 // pred_check
          %p440 = pneg %p104
        $region18: #{tpu_custom_call.1} parent=11 // pred_check_branch
          %442 = sbr.rel (%p440) target = $region20
        $region19: #{tpu_custom_call.1} parent=11 // pred_region
          _
        $region20: #{tpu_custom_call.1} parent=11 // pred_fallthru
          _
        // Predicated region
        $region21: #{tpu_custom_call.1} parent=11 // pred_check
          %p443 = pneg %p125
        $region22: #{tpu_custom_call.1} parent=11 // pred_check_branch
          %445 = sbr.rel (%p443) target = $region24
        $region23: #{tpu_custom_call.1} parent=11 // pred_region
          _
        $region24: #{tpu_custom_call.1} parent=11 // pred_fallthru
          _
        // Predicated region
        $region25: #{tpu_custom_call.1} parent=11 // pred_check
          %p446 = pneg %p146
        $region26: #{tpu_custom_call.1} parent=11 // pred_check_branch
          %448 = sbr.rel (%p446) target = $region28
        $region27: #{tpu_custom_call.1} parent=11 // pred_region
          _
        $region28: #{tpu_custom_call.1} parent=11 // pred_fallthru
          _
        // Predicated region
        $region29: #{tpu_custom_call.1} parent=11 // pred_check
          %p449 = pneg %p375
        $region30: #{tpu_custom_call.1} parent=11 // pred_check_branch
          %451 = sbr.rel (%p449) target = $region32
        $region31: #{tpu_custom_call.1} parent=11 // pred_region
          _
        $region32: #{tpu_custom_call.1} parent=11 // pred_fallthru
          _
        // Predicated region
        $region33: #{tpu_custom_call.1} parent=11 // pred_check
          %p452 = pneg %p396
        $region34: #{tpu_custom_call.1} parent=11 // pred_check_branch
          %454 = sbr.rel (%p452) target = $region36
        $region35: #{tpu_custom_call.1} parent=11 // pred_region
          _
        $region36: #{tpu_custom_call.1} parent=11 // pred_fallthru
          _
      $region12: #{tpu_custom_call.1} parent=5 // pred_fallthru
        _
      %p455 = scmp.lt.s32.totalorder %s24, 4
      // Predicated region
      $region37: #{tpu_custom_call.1} parent=5 // pred_check
        %p456 = pneg %p455
      $region38: #{tpu_custom_call.1} parent=5 // pred_check_branch
        %458 = sbr.rel (%p456) target = $region40
      $region39: #{tpu_custom_call.1} parent=5 // pred_region
        // Predicated region
        $region41: #{tpu_custom_call.1} parent=39 // pred_check
          %p459 = pneg %p56
        $region42: #{tpu_custom_call.1} parent=39 // pred_check_branch
          %461 = sbr.rel (%p459) target = $region44
        $region43: #{tpu_custom_call.1} parent=39 // pred_region
          %p462 = scmp.lt.s32.totalorder %s31, 1
          %s463 = scalar_select %p462, %s31, 1
          %s464 = smul.addr %s463, 8
          %s465 = scalar_lea.vmem %s0, %s464
        $region44: #{tpu_custom_call.1} parent=39 // pred_fallthru
          _
        // Predicated region
        $region45: #{tpu_custom_call.1} parent=39 // pred_check
          %p466 = pneg %p166
        $region46: #{tpu_custom_call.1} parent=39 // pred_check_branch
          %468 = sbr.rel (%p466) target = $region48
        $region47: #{tpu_custom_call.1} parent=39 // pred_region
          %p469 = scmp.lt.s32.totalorder %s32, 1
          %s470 = scalar_select %p469, %s32, 1
          %s471 = smul.addr %s470, 4
          %s472 = smul.addr %s471, 4
          %s473 = scalar_lea.vmem %s5, %s472
        $region48: #{tpu_custom_call.1} parent=39 // pred_fallthru
          _
        // Predicated region
        $region49: #{tpu_custom_call.1} parent=39 // pred_check
          %p474 = pneg %p192
        $region50: #{tpu_custom_call.1} parent=39 // pred_check_branch
          %476 = sbr.rel (%p474) target = $region52
        $region51: #{tpu_custom_call.1} parent=39 // pred_region
          %p477 = scmp.lt.s32.totalorder %s32, 1
          %s478 = scalar_select %p477, %s32, 1
          %s479 = scalar_lea.vmem %s6, %s478
        $region52: #{tpu_custom_call.1} parent=39 // pred_fallthru
          _
        // Predicated region
        $region53: #{tpu_custom_call.1} parent=39 // pred_check
          %p480 = pneg %p218
        $region54: #{tpu_custom_call.1} parent=39 // pred_check_branch
          %482 = sbr.rel (%p480) target = $region56
        $region55: #{tpu_custom_call.1} parent=39 // pred_region
          %p483 = scmp.lt.s32.totalorder %s32, 1
          %s484 = scalar_select %p483, %s32, 1
          %s485 = smul.addr %s484, 8
          %s486 = smul.addr %s485, 4
          %s487 = scalar_lea.vmem %s7, %s486
        $region56: #{tpu_custom_call.1} parent=39 // pred_fallthru
          _
        // Predicated region
        $region57: #{tpu_custom_call.1} parent=39 // pred_check
          %p488 = pneg %p244
        $region58: #{tpu_custom_call.1} parent=39 // pred_check_branch
          %490 = sbr.rel (%p488) target = $region60
        $region59: #{tpu_custom_call.1} parent=39 // pred_region
          %p491 = scmp.lt.s32.totalorder %s32, 1
          %s492 = scalar_select %p491, %s32, 1
          %s493 = scalar_lea.vmem %s8, %s492
        $region60: #{tpu_custom_call.1} parent=39 // pred_fallthru
          _
        // Predicated region
        $region61: #{tpu_custom_call.1} parent=39 // pred_check
          %p494 = pneg %p270
        $region62: #{tpu_custom_call.1} parent=39 // pred_check_branch
          %496 = sbr.rel (%p494) target = $region64
        $region63: #{tpu_custom_call.1} parent=39 // pred_region
          %p497 = scmp.lt.s32.totalorder %s32, 1
          %s498 = scalar_select %p497, %s32, 1
          %s499 = scalar_lea.vmem %s9, %s498
        $region64: #{tpu_custom_call.1} parent=39 // pred_fallthru
          _
        // Predicated region
        $region65: #{tpu_custom_call.1} parent=39 // pred_check
          %p500 = pneg %p296
        $region66: #{tpu_custom_call.1} parent=39 // pred_check_branch
          %502 = sbr.rel (%p500) target = $region68
        $region67: #{tpu_custom_call.1} parent=39 // pred_region
          %p503 = scmp.lt.s32.totalorder %s32, 1
          %s504 = scalar_select %p503, %s32, 1
          %s505 = scalar_lea.vmem %s10, %s504
        $region68: #{tpu_custom_call.1} parent=39 // pred_fallthru
          _
        // Predicated region
        $region69: #{tpu_custom_call.1} parent=39 // pred_check
          %p506 = pneg %p322
        $region70: #{tpu_custom_call.1} parent=39 // pred_check_branch
          %508 = sbr.rel (%p506) target = $region72
        $region71: #{tpu_custom_call.1} parent=39 // pred_region
          %p509 = scmp.lt.s32.totalorder %s32, 1
          %s510 = scalar_select %p509, %s32, 1
          %s511 = scalar_lea.vmem %s11, %s510
        $region72: #{tpu_custom_call.1} parent=39 // pred_fallthru
          _
        // Predicated region
        $region73: #{tpu_custom_call.1} parent=39 // pred_check
          %p512 = pneg %p348
        $region74: #{tpu_custom_call.1} parent=39 // pred_check_branch
          %514 = sbr.rel (%p512) target = $region76
        $region75: #{tpu_custom_call.1} parent=39 // pred_region
          %p515 = scmp.lt.s32.totalorder %s32, 1
          %s516 = scalar_select %p515, %s32, 1
          %s517 = scalar_lea.vmem %s12, %s516
        $region76: #{tpu_custom_call.1} parent=39 // pred_fallthru
          _
      $region40: #{tpu_custom_call.1} parent=5 // pred_fallthru
        _
      %p518 = scmp.le.s32.totalorder 1, %s24
      %p519 = scmp.lt.s32.totalorder %s24, 5
      %p520 = pnand %p518, %p519
      %p521 = pneg %p520
      // Predicated region
      $region77: #{tpu_custom_call.1} parent=5 // pred_check
        _
      $region78: #{tpu_custom_call.1} parent=5 // pred_check_branch
        %523 = sbr.rel (%p520) target = $region80
      $region79: #{tpu_custom_call.1} parent=5 // pred_region
        %s524 = ssub.s32 %s24, 1
        %p525 = scmp.lt.s32.totalorder %s33, 1
        %s526 = scalar_select %p525, %s33, 1
        %s527 = smul.addr %s526, 8
        %s528 = scalar_lea.vmem %s0, %s527
        %p529 = pneg %p62
        %p530 = pneg %p59
        %p531 = pneg %p83
        %p532 = pneg %p80
        %p533 = pneg %p104
        %p534 = pneg %p101
        %p535 = pneg %p125
        %p536 = pneg %p122
        %p537 = pneg %p146
        %p538 = pneg %p143
        %p539 = scmp.lt.s32.totalorder %s34, 1
        %s540 = scalar_select %p539, %s34, 1
        %s541 = smul.addr %s540, 4
        %s542 = smul.addr %s541, 4
        %s543 = scalar_lea.vmem %s5, %s542
        %p544 = pneg %p172
        %p545 = pneg %p169
        %p546 = scmp.lt.s32.totalorder %s34, 1
        %s547 = scalar_select %p546, %s34, 1
        %s548 = scalar_lea.vmem %s6, %s547
        %p549 = pneg %p198
        %p550 = pneg %p195
        %p551 = scmp.lt.s32.totalorder %s34, 1
        %s552 = scalar_select %p551, %s34, 1
        %s553 = smul.addr %s552, 8
        %s554 = smul.addr %s553, 4
        %s555 = scalar_lea.vmem %s7, %s554
        %p556 = pneg %p224
        %p557 = pneg %p221
        %p558 = scmp.lt.s32.totalorder %s34, 1
        %s559 = scalar_select %p558, %s34, 1
        %s560 = scalar_lea.vmem %s8, %s559
        %p561 = pneg %p250
        %p562 = pneg %p247
        %p563 = scmp.lt.s32.totalorder %s34, 1
        %s564 = scalar_select %p563, %s34, 1
        %s565 = scalar_lea.vmem %s9, %s564
        %p566 = pneg %p276
        %p567 = pneg %p273
        %p568 = scmp.lt.s32.totalorder %s34, 1
        %s569 = scalar_select %p568, %s34, 1
        %s570 = scalar_lea.vmem %s10, %s569
        %p571 = pneg %p302
        %p572 = pneg %p299
        %p573 = scmp.lt.s32.totalorder %s34, 1
        %s574 = scalar_select %p573, %s34, 1
        %s575 = scalar_lea.vmem %s11, %s574
        %p576 = pneg %p328
        %p577 = pneg %p325
        %p578 = scmp.lt.s32.totalorder %s34, 1
        %s579 = scalar_select %p578, %s34, 1
        %s580 = scalar_lea.vmem %s12, %s579
        %p581 = pneg %p354
        %p582 = pneg %p351
        %p583 = pneg %p375
        %p584 = pneg %p372
        %p585 = pneg %p396
        %p586 = pneg %p393
        %p587 = pneg %p422
        %p588 = pneg %p419
        %s589 = sand.u32 %s409, 1
        %s590 = scalar_lea.sflag [#allocation4], %s589
        %s591 = sand.u32 %s409, 1
        %s592 = scalar_lea.vmem [#allocation3], %s591
        %p593 = scmp.lt.s32.totalorder %s33, 1
        %s594 = scalar_select %p593, %s33, 1
        %s595 = smul.addr %s594, 8
        %s596 = scalar_lea.vmem %s0, %s595
        %p597 = scmp.lt.s32.totalorder %s34, 1
        %s598 = scalar_select %p597, %s34, 1
        %s599 = smul.addr %s598, 4
        %s600 = smul.addr %s599, 4
        %s601 = scalar_lea.vmem %s5, %s600
        %p602 = scmp.lt.s32.totalorder %s34, 1
        %s603 = scalar_select %p602, %s34, 1
        %s604 = scalar_lea.vmem %s6, %s603
        %p605 = scmp.lt.s32.totalorder %s34, 1
        %s606 = scalar_select %p605, %s34, 1
        %s607 = smul.addr %s606, 8
        %s608 = smul.addr %s607, 4
        %s609 = scalar_lea.vmem %s7, %s608
        %p610 = scmp.lt.s32.totalorder %s34, 1
        %s611 = scalar_select %p610, %s34, 1
        %s612 = scalar_lea.vmem %s8, %s611
        %p613 = scmp.lt.s32.totalorder %s34, 1
        %s614 = scalar_select %p613, %s34, 1
        %s615 = scalar_lea.vmem %s9, %s614
        %p616 = scmp.lt.s32.totalorder %s34, 1
        %s617 = scalar_select %p616, %s34, 1
        %s618 = scalar_lea.vmem %s10, %s617
        %p619 = scmp.lt.s32.totalorder %s34, 1
        %s620 = scalar_select %p619, %s34, 1
        %s621 = scalar_lea.vmem %s11, %s620
        %p622 = scmp.lt.s32.totalorder %s34, 1
        %s623 = scalar_select %p622, %s34, 1
        %s624 = scalar_lea.vmem %s12, %s623
        %p626 = scmp.eq.s32.totalorder %s34, 0
        // Predicated region
        $region81: #{tpu_custom_call.1} parent=79 // pred_check
          %p627 = pneg %p626
        $region82: #{tpu_custom_call.1} parent=79 // pred_check_branch
          %629 = sbr.rel (%p627) target = $region84
        $region83: #{tpu_custom_call.1} parent=79 // pred_region
          %v630 = vld [vmem:[%s596] sm:$0xff]
          %v631 = vld [vmem:[%s3] sm:$0x3]
          %v632 = vpack.c.bf16 %v630, %v630
          %v633 = vld [vmem:[%s4] sm:$0x1]
          %v635 = vlaneseq
          %v636 = vshrl.u32 %v635, 7
          %v637 = vsub.s32 0, %v636
          %v638 = vrot.slane %v633, %v637
          %vm640 = vcmask 31744
          %v642 = vsel %vm640, %v632, 0
          %vm644 = vcmask 1041408
          %v646 = vsel %vm644, %v631, 0
          %648 = vmatprep.subr.bf16.mxu0 0
          %649 = vmatpush1.bf16.msra.mxu0 %v646
          %650 = vmatprep.subr.bf16.mxu0 0
          %651 = vmatpush1.bf16.msra.mxu0 0
          %652 = vmatprep.subr.bf16.mxu0 0
          %653 = vmatpush1.bf16.msra.mxu0 0
          %654 = vmatprep.subr.bf16.mxu0 0
          %655 = vmatpush1.bf16.msra.mxu0 0
          %656 = vmatprep.subr.bf16.mxu0 0
          %657 = vmatpush1.bf16.msra.mxu0 0
          %658 = vmatprep.subr.bf16.mxu0 0
          %659 = vmatpush1.bf16.msra.mxu0 0
          %660 = vmatprep.subr.bf16.mxu0 0
          %661 = vmatpush1.bf16.msra.mxu0 0
          %662 = vmatprep.subr.bf16.mxu0 0
          %663 = vmatpush1.bf16.msra.mxu0 0
          %664 = vmatprep.subr.bf16.mxu0 0
          %665 = vmatpush1.bf16.msra.mxu0 0
          %666 = vmatprep.subr.bf16.mxu0 0
          %667 = vmatpush1.bf16.msra.mxu0 0
          %668 = vmatprep.subr.bf16.mxu0 0
          %669 = vmatpush1.bf16.msra.mxu0 0
          %670 = vmatprep.subr.bf16.mxu0 0
          %671 = vmatpush1.bf16.msra.mxu0 0
          %672 = vmatprep.subr.bf16.mxu0 0
          %673 = vmatpush1.bf16.msra.mxu0 0
          %674 = vmatprep.subr.bf16.mxu0 0
          %675 = vmatpush1.bf16.msra.mxu0 0
          %676 = vmatprep.subr.bf16.mxu0 0
          %677 = vmatpush1.bf16.msra.mxu0 0
          %678 = vmatprep.subr.bf16.mxu0 0
          %679 = vmatpush1.bf16.msra.mxu0 0
          %680 = vmatprep.mubr.bf16.mxu0 0
          %681 = vmatmul.mubr.bf16.gmra.mrb[0].mxu0 %v642
          %v682 = vpop.f32.mrb[0].mxu0
          %v683 = vadd.f32 %v638, %v682
          %v684 = vpop.f32.mrb[0].mxu0
          %v685 = vpop.f32.mrb[0].mxu0
          %v686 = vpop.f32.mrb[0].mxu0
          %687 = vdwg.mxu0
          %vm688 = vcmask 261120
          %689 = vst.msk [vmem:[#allocation2] sm:$0xff] %vm688, %v683
        $region84: #{tpu_custom_call.1} parent=79 // pred_fallthru
          _
        %v690 = vld [vmem:[#allocation2] sm:$0xff]
        %v691 = vpack.c.bf16 %v690, %v690
        %v692 = vld [vmem:[%s1] sm:$0xf]
        %vm693 = vcmask 64512
        %v695 = vsel %vm693, %v692, 0
        %vm697 = vcmask 1043456
        %v699 = vsel %vm697, %v691, 0
        %701 = vmatprep.subr.bf16.mxu0 0
        %702 = vmatpush1.bf16.msra.mxu0 %v699
        %703 = vmatprep.subr.bf16.mxu0 0
        %704 = vmatpush1.bf16.msra.mxu0 0
        %705 = vmatprep.subr.bf16.mxu0 0
        %706 = vmatpush1.bf16.msra.mxu0 0
        %707 = vmatprep.subr.bf16.mxu0 0
        %708 = vmatpush1.bf16.msra.mxu0 0
        %709 = vmatprep.subr.bf16.mxu0 0
        %710 = vmatpush1.bf16.msra.mxu0 0
        %711 = vmatprep.subr.bf16.mxu0 0
        %712 = vmatpush1.bf16.msra.mxu0 0
        %713 = vmatprep.subr.bf16.mxu0 0
        %714 = vmatpush1.bf16.msra.mxu0 0
        %715 = vmatprep.subr.bf16.mxu0 0
        %716 = vmatpush1.bf16.msra.mxu0 0
        %717 = vmatprep.subr.bf16.mxu0 0
        %718 = vmatpush1.bf16.msra.mxu0 0
        %719 = vmatprep.subr.bf16.mxu0 0
        %720 = vmatpush1.bf16.msra.mxu0 0
        %721 = vmatprep.subr.bf16.mxu0 0
        %722 = vmatpush1.bf16.msra.mxu0 0
        %723 = vmatprep.subr.bf16.mxu0 0
        %724 = vmatpush1.bf16.msra.mxu0 0
        %725 = vmatprep.subr.bf16.mxu0 0
        %726 = vmatpush1.bf16.msra.mxu0 0
        %727 = vmatprep.subr.bf16.mxu0 0
        %728 = vmatpush1.bf16.msra.mxu0 0
        %729 = vmatprep.subr.bf16.mxu0 0
        %730 = vmatpush1.bf16.msra.mxu0 0
        %731 = vmatprep.subr.bf16.mxu0 0
        %732 = vmatpush1.bf16.msra.mxu0 0
        %733 = vmatprep.mubr.bf16.mxu0 0
        %734 = vmatmul.mubr.bf16.gmra.mrb[0].mxu0 %v695
        %v735 = vpop.f32.mrb[0].mxu0
        %v736 = vadd.f32 0.0, %v735
        %v737 = vpop.f32.mrb[0].mxu0
        %v738 = vpop.f32.mrb[0].mxu0
        %v739 = vpop.f32.mrb[0].mxu0
        %740 = vdwg.mxu0
        %v741 = vld [vmem:[%s2] sm:$0xf]
        %v743 = vsel %vm693, %v741, 0
        %745 = vmatprep.subr.bf16.mxu0 0
        %746 = vmatpush1.bf16.msra.mxu0 %v699
        %747 = vmatprep.subr.bf16.mxu0 0
        %748 = vmatpush1.bf16.msra.mxu0 0
        %749 = vmatprep.subr.bf16.mxu0 0
        %750 = vmatpush1.bf16.msra.mxu0 0
        %751 = vmatprep.subr.bf16.mxu0 0
        %752 = vmatpush1.bf16.msra.mxu0 0
        %753 = vmatprep.subr.bf16.mxu0 0
        %754 = vmatpush1.bf16.msra.mxu0 0
        %755 = vmatprep.subr.bf16.mxu0 0
        %756 = vmatpush1.bf16.msra.mxu0 0
        %757 = vmatprep.subr.bf16.mxu0 0
        %758 = vmatpush1.bf16.msra.mxu0 0
        %759 = vmatprep.subr.bf16.mxu0 0
        %760 = vmatpush1.bf16.msra.mxu0 0
        %761 = vmatprep.subr.bf16.mxu0 0
        %762 = vmatpush1.bf16.msra.mxu0 0
        %763 = vmatprep.subr.bf16.mxu0 0
        %764 = vmatpush1.bf16.msra.mxu0 0
        %765 = vmatprep.subr.bf16.mxu0 0
        %766 = vmatpush1.bf16.msra.mxu0 0
        %767 = vmatprep.subr.bf16.mxu0 0
        %768 = vmatpush1.bf16.msra.mxu0 0
        %769 = vmatprep.subr.bf16.mxu0 0
        %770 = vmatpush1.bf16.msra.mxu0 0
        %771 = vmatprep.subr.bf16.mxu0 0
        %772 = vmatpush1.bf16.msra.mxu0 0
        %773 = vmatprep.subr.bf16.mxu0 0
        %774 = vmatpush1.bf16.msra.mxu0 0
        %775 = vmatprep.subr.bf16.mxu0 0
        %776 = vmatpush1.bf16.msra.mxu0 0
        %777 = vmatprep.mubr.bf16.mxu0 0
        %778 = vmatmul.mubr.bf16.gmra.mrb[0].mxu0 %v743
        %v779 = vpop.f32.mrb[0].mxu0
        %v780 = vadd.f32 0.0, %v779
        %v781 = vpop.f32.mrb[0].mxu0
        %v782 = vpop.f32.mrb[0].mxu0
        %v783 = vpop.f32.mrb[0].mxu0
        %784 = vdwg.mxu0
        %v785 = vmul.f32 %v736, %v736
        %v786 = vmul.f32 %v780, %v780
        %v787 = vadd.f32 %v785, %v786
        %v788 = vpack.c.bf16 %v787, %v787
        %v790 = vsel %vm697, %v788, 0
        %792 = vmatprep.subr.bf16.mxu0 0
        %793 = vmatpush1.bf16.msra.mxu0 %v790
        %794 = vmatprep.subr.bf16.mxu0 0
        %795 = vmatpush1.bf16.msra.mxu0 0
        %796 = vmatprep.subr.bf16.mxu0 0
        %797 = vmatpush1.bf16.msra.mxu0 0
        %798 = vmatprep.subr.bf16.mxu0 0
        %799 = vmatpush1.bf16.msra.mxu0 0
        %800 = vmatprep.subr.bf16.mxu0 0
        %801 = vmatpush1.bf16.msra.mxu0 0
        %802 = vmatprep.subr.bf16.mxu0 0
        %803 = vmatpush1.bf16.msra.mxu0 0
        %804 = vmatprep.subr.bf16.mxu0 0
        %805 = vmatpush1.bf16.msra.mxu0 0
        %806 = vmatprep.subr.bf16.mxu0 0
        %807 = vmatpush1.bf16.msra.mxu0 0
        %808 = vmatprep.subr.bf16.mxu0 0
        %809 = vmatpush1.bf16.msra.mxu0 0
        %810 = vmatprep.subr.bf16.mxu0 0
        %811 = vmatpush1.bf16.msra.mxu0 0
        %812 = vmatprep.subr.bf16.mxu0 0
        %813 = vmatpush1.bf16.msra.mxu0 0
        %814 = vmatprep.subr.bf16.mxu0 0
        %815 = vmatpush1.bf16.msra.mxu0 0
        %816 = vmatprep.subr.bf16.mxu0 0
        %817 = vmatpush1.bf16.msra.mxu0 0
        %818 = vmatprep.subr.bf16.mxu0 0
        %819 = vmatpush1.bf16.msra.mxu0 0
        %820 = vmatprep.subr.bf16.mxu0 0
        %821 = vmatpush1.bf16.msra.mxu0 0
        %822 = vmatprep.subr.bf16.mxu0 0
        %823 = vmatpush1.bf16.msra.mxu0 0
        %824 = vmatprep.mubr.bf16.mxu0 0
        %825 = vmatmul.mubr.bf16.gmra.mrb[0].mxu0 %v695
        %v826 = vpop.f32.mrb[0].mxu0
        %v827 = vadd.f32 0.0, %v826
        %v828 = vpop.f32.mrb[0].mxu0
        %v829 = vpop.f32.mrb[0].mxu0
        %v830 = vpop.f32.mrb[0].mxu0
        %831 = vdwg.mxu0
        %v832 = vmul.f32 %v827, 0.125
        %v833 = vadd.f32 %v832, %v690
        %v834 = vadd.f32 %v690, %v833
        %v835 = vld [vmem:[%s615] sm:$0x1]
        %v836 = vld [vmem:[%s618] sm:$0x1]
        %vm837 = vcmask 261120
        %v838 = vsel %vm837, %v834, 0.0
        %839 = vadd.xlane.f32.xlu0 %v838
        %v840 = vpop.xlane.xlu0 %839
        %v841 = vrcp.pop 32.0
        %v842 = vmul.f32 %v840, %v841
        %v843 = vsub.f32 %v834, %v842
        %v844 = vmul.f32 %v843, %v843
        %v845 = vsel %vm837, %v844, 0.0
        %846 = vadd.xlane.f32.xlu0 %v845
        %v847 = vpop.xlane.xlu0 %846
        %v848 = vmul.f32 %v847, %v841
        %v849 = vadd.f32 %v848, 1e-05
        %v850 = vrsqrt.pop %v849
        %v851 = vmul.f32 %v843, %v850
        %v853 = vlaneseq
        %v854 = vshrl.u32 %v853, 7
        %v855 = vsub.s32 0, %v854
        %v856 = vrot.slane %v835, %v855
        %v858 = vmul.f32 %v851, %v856
        %v860 = vlaneseq
        %v861 = vshrl.u32 %v860, 7
        %v862 = vsub.s32 0, %v861
        %v863 = vrot.slane %v836, %v862
        %v865 = vadd.f32 %v858, %v863
        %v866 = vld [vmem:[%s601] sm:$0xf]
        %v867 = vld [vmem:[%s601 + $0x4] sm:$0xf]
        %v868 = vld [vmem:[%s601 + $0x8] sm:$0xf]
        %v869 = vld [vmem:[%s601 + $0xc] sm:$0xf]
        %v870 = vpack.c.bf16 %v865, %v865
        %v871 = vld [vmem:[%s604] sm:$0x1]
        %v873 = vlaneseq
        %v874 = vshrl.u32 %v873, 7
        %v875 = vsub.s32 0, %v874
        %v876 = vrot.slane %v871, %v875
        %v882 = vunpack.c.l.b16 %v866
        %v883 = vunpack.c.l.b16 %v867
        %v884 = vunpack.c.l.b16 %v868
        %v885 = vunpack.c.l.b16 %v869
        %v886 = vpack.c.b16 %v883, %v882
        %v887 = vpack.c.b16 %v885, %v884
        %v891 = vsel %vm837, %v870, 0
        %893 = vmatprep.subr.bf16.mxu0 0
        %894 = vmatpush1.bf16.msra.mxu0 %v886
        %895 = vmatprep.subr.bf16.mxu0 0
        %896 = vmatpush1.bf16.msra.mxu0 %v887
        %897 = vmatprep.subr.bf16.mxu0 0
        %898 = vmatpush1.bf16.msra.mxu0 0
        %899 = vmatprep.subr.bf16.mxu0 0
        %900 = vmatpush1.bf16.msra.mxu0 0
        %901 = vmatprep.subr.bf16.mxu0 0
        %902 = vmatpush1.bf16.msra.mxu0 0
        %903 = vmatprep.subr.bf16.mxu0 0
        %904 = vmatpush1.bf16.msra.mxu0 0
        %905 = vmatprep.subr.bf16.mxu0 0
        %906 = vmatpush1.bf16.msra.mxu0 0
        %907 = vmatprep.subr.bf16.mxu0 0
        %908 = vmatpush1.bf16.msra.mxu0 0
        %909 = vmatprep.subr.bf16.mxu0 0
        %910 = vmatpush1.bf16.msra.mxu0 0
        %911 = vmatprep.subr.bf16.mxu0 0
        %912 = vmatpush1.bf16.msra.mxu0 0
        %913 = vmatprep.subr.bf16.mxu0 0
        %914 = vmatpush1.bf16.msra.mxu0 0
        %915 = vmatprep.subr.bf16.mxu0 0
        %916 = vmatpush1.bf16.msra.mxu0 0
        %917 = vmatprep.subr.bf16.mxu0 0
        %918 = vmatpush1.bf16.msra.mxu0 0
        %919 = vmatprep.subr.bf16.mxu0 0
        %920 = vmatpush1.bf16.msra.mxu0 0
        %921 = vmatprep.subr.bf16.mxu0 0
        %922 = vmatpush1.bf16.msra.mxu0 0
        %923 = vmatprep.subr.bf16.mxu0 0
        %924 = vmatpush1.bf16.msra.mxu0 0
        %925 = vmatprep.mubr.bf16.mxu0 0
        %926 = vmatmul.mubr.bf16.gmra.mrb[0].mxu0 %v891
        %v927 = vpop.f32.mrb[0].mxu0
        %v928 = vadd.f32 %v876, %v927
        %v929 = vpop.f32.mrb[0].mxu0
        %v930 = vpop.f32.mrb[0].mxu0
        %v931 = vpop.f32.mrb[0].mxu0
        %932 = vdwg.mxu0
        %v933 = vmax.f32 %v928, 0.0
        %v934 = vld [vmem:[%s609] sm:$0xf]
        %v935 = vld [vmem:[%s609 + $0x4] sm:$0xf]
        %v936 = vld [vmem:[%s609 + $0x8] sm:$0xf]
        %v937 = vld [vmem:[%s609 + $0xc] sm:$0xf]
        %v938 = vld [vmem:[%s609 + $0x10] sm:$0xf]
        %v939 = vld [vmem:[%s609 + $0x14] sm:$0xf]
        %v940 = vld [vmem:[%s609 + $0x18] sm:$0xf]
        %v941 = vld [vmem:[%s609 + $0x1c] sm:$0xf]
        %v942 = vpack.c.bf16 %v933, %v933
        %v943 = vld [vmem:[%s612] sm:$0x1]
        %v945 = vlaneseq
        %v946 = vshrl.u32 %v945, 7
        %v947 = vsub.s32 0, %v946
        %v948 = vrot.slane %v943, %v947
        %v958 = vunpack.c.l.b16 %v934
        %v959 = vunpack.c.l.b16 %v935
        %v960 = vunpack.c.l.b16 %v936
        %v961 = vunpack.c.l.b16 %v937
        %v962 = vunpack.c.l.b16 %v938
        %v963 = vunpack.c.l.b16 %v939
        %v964 = vunpack.c.l.b16 %v940
        %v965 = vunpack.c.l.b16 %v941
        %v966 = vpack.c.b16 %v959, %v958
        %v967 = vpack.c.b16 %v961, %v960
        %v968 = vpack.c.b16 %v963, %v962
        %v969 = vpack.c.b16 %v965, %v964
        %vm974 = vcmask 523264
        %v976 = vsel %vm974, %v942, 0
        %978 = vmatprep.subr.bf16.mxu0 0
        %979 = vmatpush1.bf16.msra.mxu0 %v966
        %980 = vmatprep.subr.bf16.mxu0 0
        %981 = vmatpush1.bf16.msra.mxu0 %v967
        %982 = vmatprep.subr.bf16.mxu0 0
        %983 = vmatpush1.bf16.msra.mxu0 %v968
        %984 = vmatprep.subr.bf16.mxu0 0
        %985 = vmatpush1.bf16.msra.mxu0 %v969
        %986 = vmatprep.subr.bf16.mxu0 0
        %987 = vmatpush1.bf16.msra.mxu0 0
        %988 = vmatprep.subr.bf16.mxu0 0
        %989 = vmatpush1.bf16.msra.mxu0 0
        %990 = vmatprep.subr.bf16.mxu0 0
        %991 = vmatpush1.bf16.msra.mxu0 0
        %992 = vmatprep.subr.bf16.mxu0 0
        %993 = vmatpush1.bf16.msra.mxu0 0
        %994 = vmatprep.subr.bf16.mxu0 0
        %995 = vmatpush1.bf16.msra.mxu0 0
        %996 = vmatprep.subr.bf16.mxu0 0
        %997 = vmatpush1.bf16.msra.mxu0 0
        %998 = vmatprep.subr.bf16.mxu0 0
        %999 = vmatpush1.bf16.msra.mxu0 0
        %1000 = vmatprep.subr.bf16.mxu0 0
        %1001 = vmatpush1.bf16.msra.mxu0 0
        %1002 = vmatprep.subr.bf16.mxu0 0
        %1003 = vmatpush1.bf16.msra.mxu0 0
        %1004 = vmatprep.subr.bf16.mxu0 0
        %1005 = vmatpush1.bf16.msra.mxu0 0
        %1006 = vmatprep.subr.bf16.mxu0 0
        %1007 = vmatpush1.bf16.msra.mxu0 0
        %1008 = vmatprep.subr.bf16.mxu0 0
        %1009 = vmatpush1.bf16.msra.mxu0 0
        %1010 = vmatprep.mubr.bf16.mxu0 0
        %1011 = vmatmul.mubr.bf16.gmra.mrb[0].mxu0 %v976
        %v1012 = vpop.f32.mrb[0].mxu0
        %v1013 = vadd.f32 %v948, %v1012
        %v1014 = vpop.f32.mrb[0].mxu0
        %v1015 = vpop.f32.mrb[0].mxu0
        %v1016 = vpop.f32.mrb[0].mxu0
        %1017 = vdwg.mxu0
        %v1018 = vadd.f32 %v865, %v1013
        %v1019 = vld [vmem:[%s621] sm:$0x1]
        %v1020 = vld [vmem:[%s624] sm:$0x1]
        %v1021 = vsel %vm837, %v1018, 0.0
        %1022 = vadd.xlane.f32.xlu0 %v1021
        %v1023 = vpop.xlane.xlu0 %1022
        %v1024 = vmul.f32 %v1023, %v841
        %v1025 = vsub.f32 %v1018, %v1024
        %v1026 = vmul.f32 %v1025, %v1025
        %v1027 = vsel %vm837, %v1026, 0.0
        %1028 = vadd.xlane.f32.xlu0 %v1027
        %v1029 = vpop.xlane.xlu0 %1028
        %v1030 = vmul.f32 %v1029, %v841
        %v1031 = vadd.f32 %v1030, 1e-05
        %v1032 = vrsqrt.pop %v1031
        %v1033 = vmul.f32 %v1025, %v1032
        %v1035 = vlaneseq
        %v1036 = vshrl.u32 %v1035, 7
        %v1037 = vsub.s32 0, %v1036
        %v1038 = vrot.slane %v1019, %v1037
        %v1040 = vmul.f32 %v1033, %v1038
        %v1042 = vlaneseq
        %v1043 = vshrl.u32 %v1042, 7
        %v1044 = vsub.s32 0, %v1043
        %v1045 = vrot.slane %v1020, %v1044
        %v1047 = vadd.f32 %v1040, %v1045
        %1048 = vst.msk [vmem:[#allocation2] sm:$0xff] %vm837, %v1047
        %p1049 = scmp.eq.s32.totalorder %s34, 1
        // Predicated region
        $region85: #{tpu_custom_call.1} parent=79 // pred_check
          %p1050 = pneg %p1049
        $region86: #{tpu_custom_call.1} parent=79 // pred_check_branch
          %1052 = sbr.rel (%p1050) target = $region88
        $region87: #{tpu_custom_call.1} parent=79 // pred_region
          %v1053 = vld [vmem:[%s13] sm:$0x1]
          %v1054 = vld [vmem:[%s14] sm:$0x1]
          %vm1055 = vcmask 261127
          %v1056 = vsel %vm1055, %v1047, 0.0
          %1057 = vadd.xlane.f32.xlu0 %v1056
          %v1058 = vpop.xlane.xlu0 %1057
          %v1059 = vmul.f32 %v1058, %v841
          %v1060 = vsub.f32 %v1047, %v1059
          %v1061 = vmul.f32 %v1060, %v1060
          %v1062 = vsel %vm1055, %v1061, 0.0
          %1063 = vadd.xlane.f32.xlu0 %v1062
          %v1064 = vpop.xlane.xlu0 %1063
          %v1065 = vmul.f32 %v1064, %v841
          %v1066 = vadd.f32 %v1065, 1e-05
          %v1067 = vrsqrt.pop %v1066
          %v1068 = vmul.f32 %v1060, %v1067
          %v1070 = vlaneseq
          %v1071 = vshrl.u32 %v1070, 7
          %v1072 = vsub.s32 0, %v1071
          %v1073 = vrot.slane %v1053, %v1072
          %v1075 = vmul.f32 %v1068, %v1073
          %v1077 = vlaneseq
          %v1078 = vshrl.u32 %v1077, 7
          %v1079 = vsub.s32 0, %v1078
          %v1080 = vrot.slane %v1054, %v1079
          %v1082 = vadd.f32 %v1075, %v1080
          %1083 = vst.msk [vmem:[%s592 - $0x7] sm:$0x80] %vm1055, %v1082
        $region88: #{tpu_custom_call.1} parent=79 // pred_fallthru
          _
        %s1084 = sand.u32 %s409, 1
        %s1085 = scalar_lea.sflag [#allocation4], %s1084
        %s1086 = sand.u32 %s409, 1
        %s1087 = scalar_lea.vmem [#allocation3], %s1086
        // Predicated region
        $region89: #{tpu_custom_call.1} parent=79 // pred_check
          %p1088 = pneg %p419
        $region90: #{tpu_custom_call.1} parent=79 // pred_check_branch
          %1090 = sbr.rel (%p1088) target = $region92
        $region91: #{tpu_custom_call.1} parent=79 // pred_region
          %s1092 = ssub.s32 16, 16
          %1093 = vsyncadd %s1085, %s1092
          %s1094 = smul.addr %s33, 16
          %s1095 = scalar_lea.hbm %s15, %s1094
          %s1097 = sshll.u32 %s1087, 4
          %s1098 = int_to_ptr.vmem [resolvable:$true] %s1097
          %1100 = dma.vmem_to_hbm [thread:$0]  %s1098, 16, %s1095, %s1085
        $region92: #{tpu_custom_call.1} parent=79 // pred_fallthru
          _
      $region80: #{tpu_custom_call.1} parent=5 // pred_fallthru
        _
      %p1101 = scmp.le.s32.totalorder 2, %s24
      // Predicated region
      $region93: #{tpu_custom_call.1} parent=5 // pred_check
        %p1102 = pneg %p1101
      $region94: #{tpu_custom_call.1} parent=5 // pred_check_branch
        %1104 = sbr.rel (%p1102) target = $region96
      $region95: #{tpu_custom_call.1} parent=5 // pred_region
        %s1105 = ssub.s32 %s24, 2
        // Predicated region
        $region97: #{tpu_custom_call.1} parent=95 // pred_check
          %p1106 = pneg %p425
        $region98: #{tpu_custom_call.1} parent=95 // pred_check_branch
          %1108 = sbr.rel (%p1106) target = $region100
        $region99: #{tpu_custom_call.1} parent=95 // pred_region
          %s1109 = sand.u32 %s410, 1
          %s1110 = scalar_lea.sflag [#allocation4], %s1109
          %s1111 = sand.u32 %s410, 1
          %s1112 = scalar_lea.vmem [#allocation3], %s1111
          %1113 = dma.done %s1110, 16
        $region100: #{tpu_custom_call.1} parent=95 // pred_fallthru
          _
      $region96: #{tpu_custom_call.1} parent=5 // pred_fallthru
        _
    $region6: #{tpu_custom_call.1} parent=1 // loop_footer
      %s28 = sadd.s32 1, %s24
    $region7: #{tpu_custom_call.1} parent=1 // loop_footer_branch
      %23 = sbr.rel target = $region3
    $region8: #{tpu_custom_call.1} parent=1 // loop_exit
      _
    %1114 = vsyncpa [#allocation4], 1
    %s1115 = scalar_lea.sflag [#allocation4], 1
    %1116 = vsyncpa %s1115, 1

</llo_original>
